<compile_context>
chip_gen: v6e
topology: v6e:2x2x1
jax: 0.10.0
libtpu: 0.0.40
codegen_flags: <defaults>
</compile_context>

<pallas_src>
import math

import jax
import jax.numpy as jnp
from jax import lax
from jax.experimental import pallas as pl
from jax.experimental.pallas import tpu as pltpu

KMAX = 13           # largest depthwise kernel; 7x7 / 3x3 / identity fold into it
PAD = KMAX // 2
CHUNK = 8           # row-chunk size for the one-time scratch build (bounds vregs)


def pam_kernel(x_ref, w_ref, b_ref, o_ref, xpad_ref, shift_ref):
    # x_ref    : (1, S, S, Ct)           unpadded NHWC frame (resident across row tiles)
    # w_ref    : (KMAX, KMAX, Ct)        folded weights, indexed [dj, di, ch]
    # b_ref    : (1, Ct)                 folded bias
    # o_ref    : (1, tR, S, Ct)          output row tile
    # xpad_ref : (S+12, S+12, Ct)        zero-padded frame scratch
    # shift_ref: (KMAX, S+12, S, Ct)     column-shifted padded frames
    S = x_ref.shape[1]
    Ct = x_ref.shape[3]
    tR = o_ref.shape[1]
    Sp = S + 2 * PAD
    ri = pl.program_id(2)

    # One-time (per batch, channel-tile) build of the padded + shifted scratch.
    @pl.when(ri == 0)
    def _():
        # Zero only the halo strips (top/bottom PAD rows, left/right PAD cols).
        zrow = jnp.zeros((PAD, Sp, Ct), xpad_ref.dtype)
        xpad_ref[0:PAD, :, :] = zrow
        xpad_ref[PAD + S:Sp, :, :] = zrow
        zcol = jnp.zeros((CHUNK, PAD, Ct), xpad_ref.dtype)
        for r in range(0, S, CHUNK):
            h = min(CHUNK, S - r)
            xpad_ref[PAD + r:PAD + r + h, 0:PAD, :] = zcol[:h]
            xpad_ref[PAD + r:PAD + r + h, PAD + S:Sp, :] = zcol[:h]
            # Copy the frame interior in bounded chunks.
            xpad_ref[PAD + r:PAD + r + h, PAD:PAD + S, :] = (
                x_ref[0, r:r + h, :, :].astype(xpad_ref.dtype))
        # Hoist the 13 sublane-misaligned column shifts out of the row loop:
        # shift[dj] = xpad[:, dj:dj+S, :] (full overwrite, no zeroing needed).
        for dj in range(KMAX):
            for r in range(0, Sp, CHUNK):
                h = min(CHUNK, Sp - r)
                shift_ref[dj, r:r + h, :, :] = xpad_ref[r:r + h, dj:dj + S, :]

    r0 = ri * tR

    # Accumulator initialized directly from the bias broadcast (hoisted, once).
    acc0 = jnp.broadcast_to(b_ref[0, :], (tR, S, Ct)).astype(jnp.float32)

    # 13x13 depthwise conv as shift-and-MAC over ALIGNED windows of the shifted
    # scratch.  Outer dj loop is a fori_loop (bounds live ranges); inner di loop
    # stays unrolled.  Live set per step: acc + one streamed (tR,S,Ct) slice.
    def dj_body(dj, acc):
        wrow = w_ref[dj]                      # (KMAX, Ct) -- ~2 vregs
        frame = shift_ref.at[dj]              # (Sp, S, Ct) view
        for di in range(KMAX):
            blk = frame[pl.ds(r0 + di, tR), :, :]      # (tR, S, Ct) aligned load
            acc = acc + blk * wrow[di, :]              # (Ct,) weight row, implicit bcast
        return acc

    acc = lax.fori_loop(0, KMAX, dj_body, acc0)
    o_ref[0] = acc.astype(o_ref.dtype)


def _fold_params(params, C):
    """Fold 13/7/3 depthwise kernels + identity residual + biases.

    Returns (w_dj_di, b_eff): w_dj_di is (KMAX, KMAX, C) indexed [dj, di, c],
    b_eff is (1, C).
    """
    (w13, b13), (w7, b7), (w3, b3) = params  # torch shapes: (dim,1,K,K), (dim,)
    w_eff = jnp.transpose(w13[:, 0], (1, 2, 0)).astype(jnp.float32)            # (13,13,C) [di,dj,c]
    p7 = (KMAX - 7) // 2
    w_eff = w_eff.at[p7:p7 + 7, p7:p7 + 7, :].add(jnp.transpose(w7[:, 0], (1, 2, 0)))
    p3 = (KMAX - 3) // 2
    w_eff = w_eff.at[p3:p3 + 3, p3:p3 + 3, :].add(jnp.transpose(w3[:, 0], (1, 2, 0)))
    w_eff = w_eff.at[PAD, PAD, :].add(1.0)                                     # + residual
    b_eff = (b13 + b7 + b3).astype(jnp.float32).reshape(1, C)
    w_dj_di = jnp.transpose(w_eff, (1, 0, 2))                                  # [dj,di,c]
    return w_dj_di, b_eff


def _pick_row_tile(S, Ct):
    """Largest divisor of S such that the real working set fits the vreg file.

    Working set per MAC step ≈ f32 accumulator (tR,S,Ct) + one streamed
    (tR,S,Ct) slice (plus a prefetched second) -> budget ~40 of 64 vregs, i.e.
    tR*S*Ct <= ~19K f32 elements.
    """
    budget_elems = 19 * 1024
    best = 1
    for t in range(1, S + 1):
        if S % t == 0 and t * S * Ct <= budget_elems:
            best = t
    return best


def pam_forward(x, params):
    """x: (B, H, C) with H = S*S (float32). Returns (B, H, C)."""
    B, H, C = x.shape
    S = int(math.sqrt(H))
    assert S * S == H, f"{x.shape}"

    w_dj_di, b_eff = _fold_params(params, C)

    Ct = 128 if C % 128 == 0 else C          # channel (lane) tile
    tR = _pick_row_tile(S, Ct)               # output row tile
    Sp = S + 2 * PAD
    grid = (B, C // Ct, S // tR)

    # (B, H, C) -> NHWC (B, S, S, C); same row-major spatial ordering as the
    # torch transpose(1,2).view(B, C, S, S).
    x_nhwc = x.reshape(B, S, S, C)

    # Derived VMEM budget (+25% headroom) instead of a fixed limit.
    f32b = 4
    sub = lambda n: ((n + 7) // 8) * 8       # sublane padding
    need = (
        Sp * sub(Sp) * Ct * f32b                     # xpad scratch
        + KMAX * Sp * sub(S) * Ct * f32b             # shifted-frame scratch
        + 2 * S * sub(S) * Ct * f32b                 # x block (double-buffered)
        + 2 * KMAX * sub(KMAX) * Ct * f32b           # w block
        + 2 * sub(1) * Ct * f32b                     # bias block
        + 2 * tR * sub(S) * Ct * f32b                # out block
    )
    vmem_limit = max(16 * 1024 * 1024, min(int(need * 1.25), 100 * 1024 * 1024))

    out = pl.pallas_call(
        pam_kernel,
        out_shape=jax.ShapeDtypeStruct((B, S, S, C), x.dtype),
        grid_spec=pltpu.PrefetchScalarGridSpec(
            num_scalar_prefetch=0,
            grid=grid,
            in_specs=[
                pl.BlockSpec((1, S, S, Ct), lambda b, ci, ri: (b, 0, 0, ci)),
                pl.BlockSpec((KMAX, KMAX, Ct), lambda b, ci, ri: (0, 0, ci)),
                pl.BlockSpec((1, Ct), lambda b, ci, ri: (0, ci)),
            ],
            out_specs=pl.BlockSpec((1, tR, S, Ct), lambda b, ci, ri: (b, ri, 0, ci)),
            scratch_shapes=[
                pltpu.VMEM((Sp, Sp, Ct), jnp.float32),
                pltpu.VMEM((KMAX, Sp, S, Ct), jnp.float32),
            ],
        ),
        compiler_params=pltpu.CompilerParams(
            dimension_semantics=("parallel", "parallel", "arbitrary"),
            vmem_limit_bytes=vmem_limit,
        ),
    )(x_nhwc, w_dj_di, b_eff)

    return out.reshape(B, H, C)


def pam_reference(x, params):
    """Pure-JAX reference mirroring the PyTorch forward (NCHW depthwise convs)."""
    B, H, C = x.shape
    S = int(math.sqrt(H))
    x_nchw = jnp.transpose(x, (0, 2, 1)).reshape(B, C, S, S)
    out = x_nchw
    for (w, b) in params:
        y = jax.lax.conv_general_dilated(
            x_nchw, w, window_strides=(1, 1), padding="SAME",
            feature_group_count=C,
            dimension_numbers=("NCHW", "OIHW", "NCHW"))
        out = out + y + b.reshape(1, C, 1, 1)
    return jnp.transpose(out.reshape(B, C, H), (0, 2, 1))


def init_params(key, dim):
    """Deterministic init matching nn.Conv2d param shapes (groups=dim)."""
    ks = jax.random.split(key, 6)

    def conv_init(kw, kb, K):
        fan_in = K * K  # in_channels per group == 1
        bound = 1.0 / math.sqrt(fan_in)
        w = jax.random.uniform(kw, (dim, 1, K, K), jnp.float32, -bound, bound)
        b = jax.random.uniform(kb, (dim,), jnp.float32, -bound, bound)
        return w, b

    return (conv_init(ks[0], ks[1], 13),
            conv_init(ks[2], ks[3], 7),
            conv_init(ks[4], ks[5], 3))


if __name__ == "__main__":
    # Small shapes: B=2, spatial 8x8 -> H=64, dim=128 (lane-aligned channels).
    B, S, dim = 2, 8, 128
    H = S * S

    key = jax.random.PRNGKey(0)
    kx, kp = jax.random.split(key)
    x = jax.random.normal(kx, (B, H, dim), jnp.float32)
    params = init_params(kp, dim)

    out = pam_forward(x, params)
    out = jax.block_until_ready(out)

    ref = pam_reference(x, params)
    assert out.shape == (B, H, dim)
    assert jnp.allclose(out, ref, atol=2e-4, rtol=2e-4), float(jnp.max(jnp.abs(out - ref)))

    print("KERNEL_OK")
</pallas_src>

<mosaic_0001>
module attributes {stable_mosaic.version = 11 : i64} {
  func.func @pam_kernel(%arg0: i32, %arg1: i32, %arg2: i32, %arg3: memref<1x8x8x128xf32, #tpu.memory_space<vmem>>, %arg4: memref<13x13x128xf32, #tpu.memory_space<vmem>>, %arg5: memref<1x128xf32, #tpu.memory_space<vmem>>, %arg6: memref<1x8x8x128xf32, #tpu.memory_space<vmem>>, %arg7: memref<20x20x128xf32, #tpu.memory_space<vmem>>, %arg8: memref<13x20x8x128xf32, #tpu.memory_space<vmem>>) attributes {dimension_semantics = [#tpu.dimension_semantics<parallel>, #tpu.dimension_semantics<parallel>, #tpu.dimension_semantics<arbitrary>], iteration_bounds = array<i64: 2, 1, 1>, scalar_prefetch = 0 : i64, scratch_operands = 2 : i64, tpu.core_type = #tpu.core_type<tc>, window_params = [{transform_indices = @transform_0, window_bounds = array<i64: 1, 8, 8, 128>}, {transform_indices = @transform_1, window_bounds = array<i64: 13, 13, 128>}, {transform_indices = @transform_2, window_bounds = array<i64: 1, 128>}, {transform_indices = @transform_3, window_bounds = array<i64: 1, 8, 8, 128>}]} {
    %c0_i32 = arith.constant 0 : i32
    %0 = arith.cmpi eq, %arg2, %c0_i32 : i32
    %1 = arith.extui %0 : i1 to i32
    %c0_i32_0 = arith.constant 0 : i32
    %2 = arith.cmpi ne, %1, %c0_i32_0 : i32
    scf.if %2 {
      %cst = arith.constant 0.000000e+00 : f32
      %13 = vector.broadcast %cst : f32 to vector<6x20x128xf32>
      %c0_8 = arith.constant 0 : index
      %c0_9 = arith.constant 0 : index
      %c0_10 = arith.constant 0 : index
      %14 = vector.load %arg7[%c0_8, %c0_9, %c0_10] : memref<20x20x128xf32, #tpu.memory_space<vmem>>, vector<6x20x128xf32>
      tpu.vector_store %arg7[%c0_8, %c0_9, %c0_10], %13 {strides = array<i32>} : memref<20x20x128xf32, #tpu.memory_space<vmem>>, vector<6x20x128xf32>,
      %c14 = arith.constant 14 : index
      %c0_11 = arith.constant 0 : index
      %c0_12 = arith.constant 0 : index
      %15 = vector.load %arg7[%c14, %c0_11, %c0_12] : memref<20x20x128xf32, #tpu.memory_space<vmem>>, vector<6x20x128xf32>
      tpu.vector_store %arg7[%c14, %c0_11, %c0_12], %13 {strides = array<i32>} : memref<20x20x128xf32, #tpu.memory_space<vmem>>, vector<6x20x128xf32>,
      %cst_13 = arith.constant 0.000000e+00 : f32
      %16 = vector.broadcast %cst_13 : f32 to vector<8x6x128xf32>
      %c6 = arith.constant 6 : index
      %c0_14 = arith.constant 0 : index
      %c0_15 = arith.constant 0 : index
      %17 = vector.load %arg7[%c6, %c0_14, %c0_15] : memref<20x20x128xf32, #tpu.memory_space<vmem>>, vector<8x6x128xf32>
      tpu.vector_store %arg7[%c6, %c0_14, %c0_15], %16 {strides = array<i32>} : memref<20x20x128xf32, #tpu.memory_space<vmem>>, vector<8x6x128xf32>,
      %c6_16 = arith.constant 6 : index
      %c14_17 = arith.constant 14 : index
      %c0_18 = arith.constant 0 : index
      %18 = vector.load %arg7[%c6_16, %c14_17, %c0_18] : memref<20x20x128xf32, #tpu.memory_space<vmem>>, vector<8x6x128xf32>
      tpu.vector_store %arg7[%c6_16, %c14_17, %c0_18], %16 {strides = array<i32>} : memref<20x20x128xf32, #tpu.memory_space<vmem>>, vector<8x6x128xf32>,
      %c0_19 = arith.constant 0 : index
      %c0_20 = arith.constant 0 : index
      %c0_21 = arith.constant 0 : index
      %c0_22 = arith.constant 0 : index
      %19 = vector.load %arg3[%c0_19, %c0_20, %c0_21, %c0_22] : memref<1x8x8x128xf32, #tpu.memory_space<vmem>>, vector<1x8x8x128xf32>
      %20 = vector.shape_cast %19 : vector<1x8x8x128xf32> to vector<8x8x128xf32>
      %c6_23 = arith.constant 6 : index
      %c6_24 = arith.constant 6 : index
      %c0_25 = arith.constant 0 : index
      %21 = vector.load %arg7[%c6_23, %c6_24, %c0_25] : memref<20x20x128xf32, #tpu.memory_space<vmem>>, vector<8x8x128xf32>
      tpu.vector_store %arg7[%c6_23, %c6_24, %c0_25], %20 {strides = array<i32>} : memref<20x20x128xf32, #tpu.memory_space<vmem>>, vector<8x8x128xf32>,
      %c0_26 = arith.constant 0 : index
      %c0_27 = arith.constant 0 : index
      %c0_28 = arith.constant 0 : index
      %22 = vector.load %arg7[%c0_26, %c0_27, %c0_28] : memref<20x20x128xf32, #tpu.memory_space<vmem>>, vector<8x8x128xf32>
      %c0_29 = arith.constant 0 : index
      %c0_30 = arith.constant 0 : index
      %c0_31 = arith.constant 0 : index
      %c0_32 = arith.constant 0 : index
      %23 = vector.load %arg8[%c0_29, %c0_30, %c0_31, %c0_32] : memref<13x20x8x128xf32, #tpu.memory_space<vmem>>, vector<1x8x8x128xf32>
      %24 = vector.shape_cast %23 : vector<1x8x8x128xf32> to vector<8x8x128xf32>
      %25 = vector.shape_cast %22 : vector<8x8x128xf32> to vector<1x8x8x128xf32>
      tpu.vector_store %arg8[%c0_29, %c0_30, %c0_31, %c0_32], %25 {strides = array<i32>} : memref<13x20x8x128xf32, #tpu.memory_space<vmem>>, vector<1x8x8x128xf32>,
      %c8 = arith.constant 8 : index
      %c0_33 = arith.constant 0 : index
      %c0_34 = arith.constant 0 : index
      %26 = vector.load %arg7[%c8, %c0_33, %c0_34] : memref<20x20x128xf32, #tpu.memory_space<vmem>>, vector<8x8x128xf32>
      %c0_35 = arith.constant 0 : index
      %c8_36 = arith.constant 8 : index
      %c0_37 = arith.constant 0 : index
      %c0_38 = arith.constant 0 : index
      %27 = vector.load %arg8[%c0_35, %c8_36, %c0_37, %c0_38] : memref<13x20x8x128xf32, #tpu.memory_space<vmem>>, vector<1x8x8x128xf32>
      %28 = vector.shape_cast %27 : vector<1x8x8x128xf32> to vector<8x8x128xf32>
      %29 = vector.shape_cast %26 : vector<8x8x128xf32> to vector<1x8x8x128xf32>
      tpu.vector_store %arg8[%c0_35, %c8_36, %c0_37, %c0_38], %29 {strides = array<i32>} : memref<13x20x8x128xf32, #tpu.memory_space<vmem>>, vector<1x8x8x128xf32>,
      %c16 = arith.constant 16 : index
      %c0_39 = arith.constant 0 : index
      %c0_40 = arith.constant 0 : index
      %30 = vector.load %arg7[%c16, %c0_39, %c0_40] : memref<20x20x128xf32, #tpu.memory_space<vmem>>, vector<4x8x128xf32>
      %c0_41 = arith.constant 0 : index
      %c16_42 = arith.constant 16 : index
      %c0_43 = arith.constant 0 : index
      %c0_44 = arith.constant 0 : index
      %31 = vector.load %arg8[%c0_41, %c16_42, %c0_43, %c0_44] : memref<13x20x8x128xf32, #tpu.memory_space<vmem>>, vector<1x4x8x128xf32>
      %32 = vector.shape_cast %31 : vector<1x4x8x128xf32> to vector<4x8x128xf32>
      %33 = vector.shape_cast %30 : vector<4x8x128xf32> to vector<1x4x8x128xf32>
      tpu.vector_store %arg8[%c0_41, %c16_42, %c0_43, %c0_44], %33 {strides = array<i32>} : memref<13x20x8x128xf32, #tpu.memory_space<vmem>>, vector<1x4x8x128xf32>,
      %c0_45 = arith.constant 0 : index
      %c1 = arith.constant 1 : index
      %c0_46 = arith.constant 0 : index
      %34 = vector.load %arg7[%c0_45, %c1, %c0_46] : memref<20x20x128xf32, #tpu.memory_space<vmem>>, vector<8x8x128xf32>
      %c1_47 = arith.constant 1 : index
      %c0_48 = arith.constant 0 : index
      %c0_49 = arith.constant 0 : index
      %c0_50 = arith.constant 0 : index
      %35 = vector.load %arg8[%c1_47, %c0_48, %c0_49, %c0_50] : memref<13x20x8x128xf32, #tpu.memory_space<vmem>>, vector<1x8x8x128xf32>
      %36 = vector.shape_cast %35 : vector<1x8x8x128xf32> to vector<8x8x128xf32>
      %37 = vector.shape_cast %34 : vector<8x8x128xf32> to vector<1x8x8x128xf32>
      tpu.vector_store %arg8[%c1_47, %c0_48, %c0_49, %c0_50], %37 {strides = array<i32>} : memref<13x20x8x128xf32, #tpu.memory_space<vmem>>, vector<1x8x8x128xf32>,
      %c8_51 = arith.constant 8 : index
      %c1_52 = arith.constant 1 : index
      %c0_53 = arith.constant 0 : index
      %38 = vector.load %arg7[%c8_51, %c1_52, %c0_53] : memref<20x20x128xf32, #tpu.memory_space<vmem>>, vector<8x8x128xf32>
      %c1_54 = arith.constant 1 : index
      %c8_55 = arith.constant 8 : index
      %c0_56 = arith.constant 0 : index
      %c0_57 = arith.constant 0 : index
      %39 = vector.load %arg8[%c1_54, %c8_55, %c0_56, %c0_57] : memref<13x20x8x128xf32, #tpu.memory_space<vmem>>, vector<1x8x8x128xf32>
      %40 = vector.shape_cast %39 : vector<1x8x8x128xf32> to vector<8x8x128xf32>
      %41 = vector.shape_cast %38 : vector<8x8x128xf32> to vector<1x8x8x128xf32>
      tpu.vector_store %arg8[%c1_54, %c8_55, %c0_56, %c0_57], %41 {strides = array<i32>} : memref<13x20x8x128xf32, #tpu.memory_space<vmem>>, vector<1x8x8x128xf32>,
      %c16_58 = arith.constant 16 : index
      %c1_59 = arith.constant 1 : index
      %c0_60 = arith.constant 0 : index
      %42 = vector.load %arg7[%c16_58, %c1_59, %c0_60] : memref<20x20x128xf32, #tpu.memory_space<vmem>>, vector<4x8x128xf32>
      %c1_61 = arith.constant 1 : index
      %c16_62 = arith.constant 16 : index
      %c0_63 = arith.constant 0 : index
      %c0_64 = arith.constant 0 : index
      %43 = vector.load %arg8[%c1_61, %c16_62, %c0_63, %c0_64] : memref<13x20x8x128xf32, #tpu.memory_space<vmem>>, vector<1x4x8x128xf32>
      %44 = vector.shape_cast %43 : vector<1x4x8x128xf32> to vector<4x8x128xf32>
      %45 = vector.shape_cast %42 : vector<4x8x128xf32> to vector<1x4x8x128xf32>
      tpu.vector_store %arg8[%c1_61, %c16_62, %c0_63, %c0_64], %45 {strides = array<i32>} : memref<13x20x8x128xf32, #tpu.memory_space<vmem>>, vector<1x4x8x128xf32>,
      %c0_65 = arith.constant 0 : index
      %c2 = arith.constant 2 : index
      %c0_66 = arith.constant 0 : index
      %46 = vector.load %arg7[%c0_65, %c2, %c0_66] : memref<20x20x128xf32, #tpu.memory_space<vmem>>, vector<8x8x128xf32>
      %c2_67 = arith.constant 2 : index
      %c0_68 = arith.constant 0 : index
      %c0_69 = arith.constant 0 : index
      %c0_70 = arith.constant 0 : index
      %47 = vector.load %arg8[%c2_67, %c0_68, %c0_69, %c0_70] : memref<13x20x8x128xf32, #tpu.memory_space<vmem>>, vector<1x8x8x128xf32>
      %48 = vector.shape_cast %47 : vector<1x8x8x128xf32> to vector<8x8x128xf32>
      %49 = vector.shape_cast %46 : vector<8x8x128xf32> to vector<1x8x8x128xf32>
      tpu.vector_store %arg8[%c2_67, %c0_68, %c0_69, %c0_70], %49 {strides = array<i32>} : memref<13x20x8x128xf32, #tpu.memory_space<vmem>>, vector<1x8x8x128xf32>,
      %c8_71 = arith.constant 8 : index
      %c2_72 = arith.constant 2 : index
      %c0_73 = arith.constant 0 : index
      %50 = vector.load %arg7[%c8_71, %c2_72, %c0_73] : memref<20x20x128xf32, #tpu.memory_space<vmem>>, vector<8x8x128xf32>
      %c2_74 = arith.constant 2 : index
      %c8_75 = arith.constant 8 : index
      %c0_76 = arith.constant 0 : index
      %c0_77 = arith.constant 0 : index
      %51 = vector.load %arg8[%c2_74, %c8_75, %c0_76, %c0_77] : memref<13x20x8x128xf32, #tpu.memory_space<vmem>>, vector<1x8x8x128xf32>
      %52 = vector.shape_cast %51 : vector<1x8x8x128xf32> to vector<8x8x128xf32>
      %53 = vector.shape_cast %50 : vector<8x8x128xf32> to vector<1x8x8x128xf32>
      tpu.vector_store %arg8[%c2_74, %c8_75, %c0_76, %c0_77], %53 {strides = array<i32>} : memref<13x20x8x128xf32, #tpu.memory_space<vmem>>, vector<1x8x8x128xf32>,
      %c16_78 = arith.constant 16 : index
      %c2_79 = arith.constant 2 : index
      %c0_80 = arith.constant 0 : index
      %54 = vector.load %arg7[%c16_78, %c2_79, %c0_80] : memref<20x20x128xf32, #tpu.memory_space<vmem>>, vector<4x8x128xf32>
      %c2_81 = arith.constant 2 : index
      %c16_82 = arith.constant 16 : index
      %c0_83 = arith.constant 0 : index
      %c0_84 = arith.constant 0 : index
      %55 = vector.load %arg8[%c2_81, %c16_82, %c0_83, %c0_84] : memref<13x20x8x128xf32, #tpu.memory_space<vmem>>, vector<1x4x8x128xf32>
      %56 = vector.shape_cast %55 : vector<1x4x8x128xf32> to vector<4x8x128xf32>
      %57 = vector.shape_cast %54 : vector<4x8x128xf32> to vector<1x4x8x128xf32>
      tpu.vector_store %arg8[%c2_81, %c16_82, %c0_83, %c0_84], %57 {strides = array<i32>} : memref<13x20x8x128xf32, #tpu.memory_space<vmem>>, vector<1x4x8x128xf32>,
      %c0_85 = arith.constant 0 : index
      %c3 = arith.constant 3 : index
      %c0_86 = arith.constant 0 : index
      %58 = vector.load %arg7[%c0_85, %c3, %c0_86] : memref<20x20x128xf32, #tpu.memory_space<vmem>>, vector<8x8x128xf32>
      %c3_87 = arith.constant 3 : index
      %c0_88 = arith.constant 0 : index
      %c0_89 = arith.constant 0 : index
      %c0_90 = arith.constant 0 : index
      %59 = vector.load %arg8[%c3_87, %c0_88, %c0_89, %c0_90] : memref<13x20x8x128xf32, #tpu.memory_space<vmem>>, vector<1x8x8x128xf32>
      %60 = vector.shape_cast %59 : vector<1x8x8x128xf32> to vector<8x8x128xf32>
      %61 = vector.shape_cast %58 : vector<8x8x128xf32> to vector<1x8x8x128xf32>
      tpu.vector_store %arg8[%c3_87, %c0_88, %c0_89, %c0_90], %61 {strides = array<i32>} : memref<13x20x8x128xf32, #tpu.memory_space<vmem>>, vector<1x8x8x128xf32>,
      %c8_91 = arith.constant 8 : index
      %c3_92 = arith.constant 3 : index
      %c0_93 = arith.constant 0 : index
      %62 = vector.load %arg7[%c8_91, %c3_92, %c0_93] : memref<20x20x128xf32, #tpu.memory_space<vmem>>, vector<8x8x128xf32>
      %c3_94 = arith.constant 3 : index
      %c8_95 = arith.constant 8 : index
      %c0_96 = arith.constant 0 : index
      %c0_97 = arith.constant 0 : index
      %63 = vector.load %arg8[%c3_94, %c8_95, %c0_96, %c0_97] : memref<13x20x8x128xf32, #tpu.memory_space<vmem>>, vector<1x8x8x128xf32>
      %64 = vector.shape_cast %63 : vector<1x8x8x128xf32> to vector<8x8x128xf32>
      %65 = vector.shape_cast %62 : vector<8x8x128xf32> to vector<1x8x8x128xf32>
      tpu.vector_store %arg8[%c3_94, %c8_95, %c0_96, %c0_97], %65 {strides = array<i32>} : memref<13x20x8x128xf32, #tpu.memory_space<vmem>>, vector<1x8x8x128xf32>,
      %c16_98 = arith.constant 16 : index
      %c3_99 = arith.constant 3 : index
      %c0_100 = arith.constant 0 : index
      %66 = vector.load %arg7[%c16_98, %c3_99, %c0_100] : memref<20x20x128xf32, #tpu.memory_space<vmem>>, vector<4x8x128xf32>
      %c3_101 = arith.constant 3 : index
      %c16_102 = arith.constant 16 : index
      %c0_103 = arith.constant 0 : index
      %c0_104 = arith.constant 0 : index
      %67 = vector.load %arg8[%c3_101, %c16_102, %c0_103, %c0_104] : memref<13x20x8x128xf32, #tpu.memory_space<vmem>>, vector<1x4x8x128xf32>
      %68 = vector.shape_cast %67 : vector<1x4x8x128xf32> to vector<4x8x128xf32>
      %69 = vector.shape_cast %66 : vector<4x8x128xf32> to vector<1x4x8x128xf32>
      tpu.vector_store %arg8[%c3_101, %c16_102, %c0_103, %c0_104], %69 {strides = array<i32>} : memref<13x20x8x128xf32, #tpu.memory_space<vmem>>, vector<1x4x8x128xf32>,
      %c0_105 = arith.constant 0 : index
      %c4 = arith.constant 4 : index
      %c0_106 = arith.constant 0 : index
      %70 = vector.load %arg7[%c0_105, %c4, %c0_106] : memref<20x20x128xf32, #tpu.memory_space<vmem>>, vector<8x8x128xf32>
      %c4_107 = arith.constant 4 : index
      %c0_108 = arith.constant 0 : index
      %c0_109 = arith.constant 0 : index
      %c0_110 = arith.constant 0 : index
      %71 = vector.load %arg8[%c4_107, %c0_108, %c0_109, %c0_110] : memref<13x20x8x128xf32, #tpu.memory_space<vmem>>, vector<1x8x8x128xf32>
      %72 = vector.shape_cast %71 : vector<1x8x8x128xf32> to vector<8x8x128xf32>
      %73 = vector.shape_cast %70 : vector<8x8x128xf32> to vector<1x8x8x128xf32>
      tpu.vector_store %arg8[%c4_107, %c0_108, %c0_109, %c0_110], %73 {strides = array<i32>} : memref<13x20x8x128xf32, #tpu.memory_space<vmem>>, vector<1x8x8x128xf32>,
      %c8_111 = arith.constant 8 : index
      %c4_112 = arith.constant 4 : index
      %c0_113 = arith.constant 0 : index
      %74 = vector.load %arg7[%c8_111, %c4_112, %c0_113] : memref<20x20x128xf32, #tpu.memory_space<vmem>>, vector<8x8x128xf32>
      %c4_114 = arith.constant 4 : index
      %c8_115 = arith.constant 8 : index
      %c0_116 = arith.constant 0 : index
      %c0_117 = arith.constant 0 : index
      %75 = vector.load %arg8[%c4_114, %c8_115, %c0_116, %c0_117] : memref<13x20x8x128xf32, #tpu.memory_space<vmem>>, vector<1x8x8x128xf32>
      %76 = vector.shape_cast %75 : vector<1x8x8x128xf32> to vector<8x8x128xf32>
      %77 = vector.shape_cast %74 : vector<8x8x128xf32> to vector<1x8x8x128xf32>
      tpu.vector_store %arg8[%c4_114, %c8_115, %c0_116, %c0_117], %77 {strides = array<i32>} : memref<13x20x8x128xf32, #tpu.memory_space<vmem>>, vector<1x8x8x128xf32>,
      %c16_118 = arith.constant 16 : index
      %c4_119 = arith.constant 4 : index
      %c0_120 = arith.constant 0 : index
      %78 = vector.load %arg7[%c16_118, %c4_119, %c0_120] : memref<20x20x128xf32, #tpu.memory_space<vmem>>, vector<4x8x128xf32>
      %c4_121 = arith.constant 4 : index
      %c16_122 = arith.constant 16 : index
      %c0_123 = arith.constant 0 : index
      %c0_124 = arith.constant 0 : index
      %79 = vector.load %arg8[%c4_121, %c16_122, %c0_123, %c0_124] : memref<13x20x8x128xf32, #tpu.memory_space<vmem>>, vector<1x4x8x128xf32>
      %80 = vector.shape_cast %79 : vector<1x4x8x128xf32> to vector<4x8x128xf32>
      %81 = vector.shape_cast %78 : vector<4x8x128xf32> to vector<1x4x8x128xf32>
      tpu.vector_store %arg8[%c4_121, %c16_122, %c0_123, %c0_124], %81 {strides = array<i32>} : memref<13x20x8x128xf32, #tpu.memory_space<vmem>>, vector<1x4x8x128xf32>,
      %c0_125 = arith.constant 0 : index
      %c5 = arith.constant 5 : index
      %c0_126 = arith.constant 0 : index
      %82 = vector.load %arg7[%c0_125, %c5, %c0_126] : memref<20x20x128xf32, #tpu.memory_space<vmem>>, vector<8x8x128xf32>
      %c5_127 = arith.constant 5 : index
      %c0_128 = arith.constant 0 : index
      %c0_129 = arith.constant 0 : index
      %c0_130 = arith.constant 0 : index
      %83 = vector.load %arg8[%c5_127, %c0_128, %c0_129, %c0_130] : memref<13x20x8x128xf32, #tpu.memory_space<vmem>>, vector<1x8x8x128xf32>
      %84 = vector.shape_cast %83 : vector<1x8x8x128xf32> to vector<8x8x128xf32>
      %85 = vector.shape_cast %82 : vector<8x8x128xf32> to vector<1x8x8x128xf32>
      tpu.vector_store %arg8[%c5_127, %c0_128, %c0_129, %c0_130], %85 {strides = array<i32>} : memref<13x20x8x128xf32, #tpu.memory_space<vmem>>, vector<1x8x8x128xf32>,
      %c8_131 = arith.constant 8 : index
      %c5_132 = arith.constant 5 : index
      %c0_133 = arith.constant 0 : index
      %86 = vector.load %arg7[%c8_131, %c5_132, %c0_133] : memref<20x20x128xf32, #tpu.memory_space<vmem>>, vector<8x8x128xf32>
      %c5_134 = arith.constant 5 : index
      %c8_135 = arith.constant 8 : index
      %c0_136 = arith.constant 0 : index
      %c0_137 = arith.constant 0 : index
      %87 = vector.load %arg8[%c5_134, %c8_135, %c0_136, %c0_137] : memref<13x20x8x128xf32, #tpu.memory_space<vmem>>, vector<1x8x8x128xf32>
      %88 = vector.shape_cast %87 : vector<1x8x8x128xf32> to vector<8x8x128xf32>
      %89 = vector.shape_cast %86 : vector<8x8x128xf32> to vector<1x8x8x128xf32>
      tpu.vector_store %arg8[%c5_134, %c8_135, %c0_136, %c0_137], %89 {strides = array<i32>} : memref<13x20x8x128xf32, #tpu.memory_space<vmem>>, vector<1x8x8x128xf32>,
      %c16_138 = arith.constant 16 : index
      %c5_139 = arith.constant 5 : index
      %c0_140 = arith.constant 0 : index
      %90 = vector.load %arg7[%c16_138, %c5_139, %c0_140] : memref<20x20x128xf32, #tpu.memory_space<vmem>>, vector<4x8x128xf32>
      %c5_141 = arith.constant 5 : index
      %c16_142 = arith.constant 16 : index
      %c0_143 = arith.constant 0 : index
      %c0_144 = arith.constant 0 : index
      %91 = vector.load %arg8[%c5_141, %c16_142, %c0_143, %c0_144] : memref<13x20x8x128xf32, #tpu.memory_space<vmem>>, vector<1x4x8x128xf32>
      %92 = vector.shape_cast %91 : vector<1x4x8x128xf32> to vector<4x8x128xf32>
      %93 = vector.shape_cast %90 : vector<4x8x128xf32> to vector<1x4x8x128xf32>
      tpu.vector_store %arg8[%c5_141, %c16_142, %c0_143, %c0_144], %93 {strides = array<i32>} : memref<13x20x8x128xf32, #tpu.memory_space<vmem>>, vector<1x4x8x128xf32>,
      %c0_145 = arith.constant 0 : index
      %c6_146 = arith.constant 6 : index
      %c0_147 = arith.constant 0 : index
      %94 = vector.load %arg7[%c0_145, %c6_146, %c0_147] : memref<20x20x128xf32, #tpu.memory_space<vmem>>, vector<8x8x128xf32>
      %c6_148 = arith.constant 6 : index
      %c0_149 = arith.constant 0 : index
      %c0_150 = arith.constant 0 : index
      %c0_151 = arith.constant 0 : index
      %95 = vector.load %arg8[%c6_148, %c0_149, %c0_150, %c0_151] : memref<13x20x8x128xf32, #tpu.memory_space<vmem>>, vector<1x8x8x128xf32>
      %96 = vector.shape_cast %95 : vector<1x8x8x128xf32> to vector<8x8x128xf32>
      %97 = vector.shape_cast %94 : vector<8x8x128xf32> to vector<1x8x8x128xf32>
      tpu.vector_store %arg8[%c6_148, %c0_149, %c0_150, %c0_151], %97 {strides = array<i32>} : memref<13x20x8x128xf32, #tpu.memory_space<vmem>>, vector<1x8x8x128xf32>,
      %c8_152 = arith.constant 8 : index
      %c6_153 = arith.constant 6 : index
      %c0_154 = arith.constant 0 : index
      %98 = vector.load %arg7[%c8_152, %c6_153, %c0_154] : memref<20x20x128xf32, #tpu.memory_space<vmem>>, vector<8x8x128xf32>
      %c6_155 = arith.constant 6 : index
      %c8_156 = arith.constant 8 : index
      %c0_157 = arith.constant 0 : index
      %c0_158 = arith.constant 0 : index
      %99 = vector.load %arg8[%c6_155, %c8_156, %c0_157, %c0_158] : memref<13x20x8x128xf32, #tpu.memory_space<vmem>>, vector<1x8x8x128xf32>
      %100 = vector.shape_cast %99 : vector<1x8x8x128xf32> to vector<8x8x128xf32>
      %101 = vector.shape_cast %98 : vector<8x8x128xf32> to vector<1x8x8x128xf32>
      tpu.vector_store %arg8[%c6_155, %c8_156, %c0_157, %c0_158], %101 {strides = array<i32>} : memref<13x20x8x128xf32, #tpu.memory_space<vmem>>, vector<1x8x8x128xf32>,
      %c16_159 = arith.constant 16 : index
      %c6_160 = arith.constant 6 : index
      %c0_161 = arith.constant 0 : index
      %102 = vector.load %arg7[%c16_159, %c6_160, %c0_161] : memref<20x20x128xf32, #tpu.memory_space<vmem>>, vector<4x8x128xf32>
      %c6_162 = arith.constant 6 : index
      %c16_163 = arith.constant 16 : index
      %c0_164 = arith.constant 0 : index
      %c0_165 = arith.constant 0 : index
      %103 = vector.load %arg8[%c6_162, %c16_163, %c0_164, %c0_165] : memref<13x20x8x128xf32, #tpu.memory_space<vmem>>, vector<1x4x8x128xf32>
      %104 = vector.shape_cast %103 : vector<1x4x8x128xf32> to vector<4x8x128xf32>
      %105 = vector.shape_cast %102 : vector<4x8x128xf32> to vector<1x4x8x128xf32>
      tpu.vector_store %arg8[%c6_162, %c16_163, %c0_164, %c0_165], %105 {strides = array<i32>} : memref<13x20x8x128xf32, #tpu.memory_space<vmem>>, vector<1x4x8x128xf32>,
      %c0_166 = arith.constant 0 : index
      %c7 = arith.constant 7 : index
      %c0_167 = arith.constant 0 : index
      %106 = vector.load %arg7[%c0_166, %c7, %c0_167] : memref<20x20x128xf32, #tpu.memory_space<vmem>>, vector<8x8x128xf32>
      %c7_168 = arith.constant 7 : index
      %c0_169 = arith.constant 0 : index
      %c0_170 = arith.constant 0 : index
      %c0_171 = arith.constant 0 : index
      %107 = vector.load %arg8[%c7_168, %c0_169, %c0_170, %c0_171] : memref<13x20x8x128xf32, #tpu.memory_space<vmem>>, vector<1x8x8x128xf32>
      %108 = vector.shape_cast %107 : vector<1x8x8x128xf32> to vector<8x8x128xf32>
      %109 = vector.shape_cast %106 : vector<8x8x128xf32> to vector<1x8x8x128xf32>
      tpu.vector_store %arg8[%c7_168, %c0_169, %c0_170, %c0_171], %109 {strides = array<i32>} : memref<13x20x8x128xf32, #tpu.memory_space<vmem>>, vector<1x8x8x128xf32>,
      %c8_172 = arith.constant 8 : index
      %c7_173 = arith.constant 7 : index
      %c0_174 = arith.constant 0 : index
      %110 = vector.load %arg7[%c8_172, %c7_173, %c0_174] : memref<20x20x128xf32, #tpu.memory_space<vmem>>, vector<8x8x128xf32>
      %c7_175 = arith.constant 7 : index
      %c8_176 = arith.constant 8 : index
      %c0_177 = arith.constant 0 : index
      %c0_178 = arith.constant 0 : index
      %111 = vector.load %arg8[%c7_175, %c8_176, %c0_177, %c0_178] : memref<13x20x8x128xf32, #tpu.memory_space<vmem>>, vector<1x8x8x128xf32>
      %112 = vector.shape_cast %111 : vector<1x8x8x128xf32> to vector<8x8x128xf32>
      %113 = vector.shape_cast %110 : vector<8x8x128xf32> to vector<1x8x8x128xf32>
      tpu.vector_store %arg8[%c7_175, %c8_176, %c0_177, %c0_178], %113 {strides = array<i32>} : memref<13x20x8x128xf32, #tpu.memory_space<vmem>>, vector<1x8x8x128xf32>,
      %c16_179 = arith.constant 16 : index
      %c7_180 = arith.constant 7 : index
      %c0_181 = arith.constant 0 : index
      %114 = vector.load %arg7[%c16_179, %c7_180, %c0_181] : memref<20x20x128xf32, #tpu.memory_space<vmem>>, vector<4x8x128xf32>
      %c7_182 = arith.constant 7 : index
      %c16_183 = arith.constant 16 : index
      %c0_184 = arith.constant 0 : index
      %c0_185 = arith.constant 0 : index
      %115 = vector.load %arg8[%c7_182, %c16_183, %c0_184, %c0_185] : memref<13x20x8x128xf32, #tpu.memory_space<vmem>>, vector<1x4x8x128xf32>
      %116 = vector.shape_cast %115 : vector<1x4x8x128xf32> to vector<4x8x128xf32>
      %117 = vector.shape_cast %114 : vector<4x8x128xf32> to vector<1x4x8x128xf32>
      tpu.vector_store %arg8[%c7_182, %c16_183, %c0_184, %c0_185], %117 {strides = array<i32>} : memref<13x20x8x128xf32, #tpu.memory_space<vmem>>, vector<1x4x8x128xf32>,
      %c0_186 = arith.constant 0 : index
      %c8_187 = arith.constant 8 : index
      %c0_188 = arith.constant 0 : index
      %118 = vector.load %arg7[%c0_186, %c8_187, %c0_188] : memref<20x20x128xf32, #tpu.memory_space<vmem>>, vector<8x8x128xf32>
      %c8_189 = arith.constant 8 : index
      %c0_190 = arith.constant 0 : index
      %c0_191 = arith.constant 0 : index
      %c0_192 = arith.constant 0 : index
      %119 = vector.load %arg8[%c8_189, %c0_190, %c0_191, %c0_192] : memref<13x20x8x128xf32, #tpu.memory_space<vmem>>, vector<1x8x8x128xf32>
      %120 = vector.shape_cast %119 : vector<1x8x8x128xf32> to vector<8x8x128xf32>
      %121 = vector.shape_cast %118 : vector<8x8x128xf32> to vector<1x8x8x128xf32>
      tpu.vector_store %arg8[%c8_189, %c0_190, %c0_191, %c0_192], %121 {strides = array<i32>} : memref<13x20x8x128xf32, #tpu.memory_space<vmem>>, vector<1x8x8x128xf32>,
      %c8_193 = arith.constant 8 : index
      %c8_194 = arith.constant 8 : index
      %c0_195 = arith.constant 0 : index
      %122 = vector.load %arg7[%c8_193, %c8_194, %c0_195] : memref<20x20x128xf32, #tpu.memory_space<vmem>>, vector<8x8x128xf32>
      %c8_196 = arith.constant 8 : index
      %c8_197 = arith.constant 8 : index
      %c0_198 = arith.constant 0 : index
      %c0_199 = arith.constant 0 : index
      %123 = vector.load %arg8[%c8_196, %c8_197, %c0_198, %c0_199] : memref<13x20x8x128xf32, #tpu.memory_space<vmem>>, vector<1x8x8x128xf32>
      %124 = vector.shape_cast %123 : vector<1x8x8x128xf32> to vector<8x8x128xf32>
      %125 = vector.shape_cast %122 : vector<8x8x128xf32> to vector<1x8x8x128xf32>
      tpu.vector_store %arg8[%c8_196, %c8_197, %c0_198, %c0_199], %125 {strides = array<i32>} : memref<13x20x8x128xf32, #tpu.memory_space<vmem>>, vector<1x8x8x128xf32>,
      %c16_200 = arith.constant 16 : index
      %c8_201 = arith.constant 8 : index
      %c0_202 = arith.constant 0 : index
      %126 = vector.load %arg7[%c16_200, %c8_201, %c0_202] : memref<20x20x128xf32, #tpu.memory_space<vmem>>, vector<4x8x128xf32>
      %c8_203 = arith.constant 8 : index
      %c16_204 = arith.constant 16 : index
      %c0_205 = arith.constant 0 : index
      %c0_206 = arith.constant 0 : index
      %127 = vector.load %arg8[%c8_203, %c16_204, %c0_205, %c0_206] : memref<13x20x8x128xf32, #tpu.memory_space<vmem>>, vector<1x4x8x128xf32>
      %128 = vector.shape_cast %127 : vector<1x4x8x128xf32> to vector<4x8x128xf32>
      %129 = vector.shape_cast %126 : vector<4x8x128xf32> to vector<1x4x8x128xf32>
      tpu.vector_store %arg8[%c8_203, %c16_204, %c0_205, %c0_206], %129 {strides = array<i32>} : memref<13x20x8x128xf32, #tpu.memory_space<vmem>>, vector<1x4x8x128xf32>,
      %c0_207 = arith.constant 0 : index
      %c9 = arith.constant 9 : index
      %c0_208 = arith.constant 0 : index
      %130 = vector.load %arg7[%c0_207, %c9, %c0_208] : memref<20x20x128xf32, #tpu.memory_space<vmem>>, vector<8x8x128xf32>
      %c9_209 = arith.constant 9 : index
      %c0_210 = arith.constant 0 : index
      %c0_211 = arith.constant 0 : index
      %c0_212 = arith.constant 0 : index
      %131 = vector.load %arg8[%c9_209, %c0_210, %c0_211, %c0_212] : memref<13x20x8x128xf32, #tpu.memory_space<vmem>>, vector<1x8x8x128xf32>
      %132 = vector.shape_cast %131 : vector<1x8x8x128xf32> to vector<8x8x128xf32>
      %133 = vector.shape_cast %130 : vector<8x8x128xf32> to vector<1x8x8x128xf32>
      tpu.vector_store %arg8[%c9_209, %c0_210, %c0_211, %c0_212], %133 {strides = array<i32>} : memref<13x20x8x128xf32, #tpu.memory_space<vmem>>, vector<1x8x8x128xf32>,
      %c8_213 = arith.constant 8 : index
      %c9_214 = arith.constant 9 : index
      %c0_215 = arith.constant 0 : index
      %134 = vector.load %arg7[%c8_213, %c9_214, %c0_215] : memref<20x20x128xf32, #tpu.memory_space<vmem>>, vector<8x8x128xf32>
      %c9_216 = arith.constant 9 : index
      %c8_217 = arith.constant 8 : index
      %c0_218 = arith.constant 0 : index
      %c0_219 = arith.constant 0 : index
      %135 = vector.load %arg8[%c9_216, %c8_217, %c0_218, %c0_219] : memref<13x20x8x128xf32, #tpu.memory_space<vmem>>, vector<1x8x8x128xf32>
      %136 = vector.shape_cast %135 : vector<1x8x8x128xf32> to vector<8x8x128xf32>
      %137 = vector.shape_cast %134 : vector<8x8x128xf32> to vector<1x8x8x128xf32>
      tpu.vector_store %arg8[%c9_216, %c8_217, %c0_218, %c0_219], %137 {strides = array<i32>} : memref<13x20x8x128xf32, #tpu.memory_space<vmem>>, vector<1x8x8x128xf32>,
      %c16_220 = arith.constant 16 : index
      %c9_221 = arith.constant 9 : index
      %c0_222 = arith.constant 0 : index
      %138 = vector.load %arg7[%c16_220, %c9_221, %c0_222] : memref<20x20x128xf32, #tpu.memory_space<vmem>>, vector<4x8x128xf32>
      %c9_223 = arith.constant 9 : index
      %c16_224 = arith.constant 16 : index
      %c0_225 = arith.constant 0 : index
      %c0_226 = arith.constant 0 : index
      %139 = vector.load %arg8[%c9_223, %c16_224, %c0_225, %c0_226] : memref<13x20x8x128xf32, #tpu.memory_space<vmem>>, vector<1x4x8x128xf32>
      %140 = vector.shape_cast %139 : vector<1x4x8x128xf32> to vector<4x8x128xf32>
      %141 = vector.shape_cast %138 : vector<4x8x128xf32> to vector<1x4x8x128xf32>
      tpu.vector_store %arg8[%c9_223, %c16_224, %c0_225, %c0_226], %141 {strides = array<i32>} : memref<13x20x8x128xf32, #tpu.memory_space<vmem>>, vector<1x4x8x128xf32>,
      %c0_227 = arith.constant 0 : index
      %c10 = arith.constant 10 : index
      %c0_228 = arith.constant 0 : index
      %142 = vector.load %arg7[%c0_227, %c10, %c0_228] : memref<20x20x128xf32, #tpu.memory_space<vmem>>, vector<8x8x128xf32>
      %c10_229 = arith.constant 10 : index
      %c0_230 = arith.constant 0 : index
      %c0_231 = arith.constant 0 : index
      %c0_232 = arith.constant 0 : index
      %143 = vector.load %arg8[%c10_229, %c0_230, %c0_231, %c0_232] : memref<13x20x8x128xf32, #tpu.memory_space<vmem>>, vector<1x8x8x128xf32>
      %144 = vector.shape_cast %143 : vector<1x8x8x128xf32> to vector<8x8x128xf32>
      %145 = vector.shape_cast %142 : vector<8x8x128xf32> to vector<1x8x8x128xf32>
      tpu.vector_store %arg8[%c10_229, %c0_230, %c0_231, %c0_232], %145 {strides = array<i32>} : memref<13x20x8x128xf32, #tpu.memory_space<vmem>>, vector<1x8x8x128xf32>,
      %c8_233 = arith.constant 8 : index
      %c10_234 = arith.constant 10 : index
      %c0_235 = arith.constant 0 : index
      %146 = vector.load %arg7[%c8_233, %c10_234, %c0_235] : memref<20x20x128xf32, #tpu.memory_space<vmem>>, vector<8x8x128xf32>
      %c10_236 = arith.constant 10 : index
      %c8_237 = arith.constant 8 : index
      %c0_238 = arith.constant 0 : index
      %c0_239 = arith.constant 0 : index
      %147 = vector.load %arg8[%c10_236, %c8_237, %c0_238, %c0_239] : memref<13x20x8x128xf32, #tpu.memory_space<vmem>>, vector<1x8x8x128xf32>
      %148 = vector.shape_cast %147 : vector<1x8x8x128xf32> to vector<8x8x128xf32>
      %149 = vector.shape_cast %146 : vector<8x8x128xf32> to vector<1x8x8x128xf32>
      tpu.vector_store %arg8[%c10_236, %c8_237, %c0_238, %c0_239], %149 {strides = array<i32>} : memref<13x20x8x128xf32, #tpu.memory_space<vmem>>, vector<1x8x8x128xf32>,
      %c16_240 = arith.constant 16 : index
      %c10_241 = arith.constant 10 : index
      %c0_242 = arith.constant 0 : index
      %150 = vector.load %arg7[%c16_240, %c10_241, %c0_242] : memref<20x20x128xf32, #tpu.memory_space<vmem>>, vector<4x8x128xf32>
      %c10_243 = arith.constant 10 : index
      %c16_244 = arith.constant 16 : index
      %c0_245 = arith.constant 0 : index
      %c0_246 = arith.constant 0 : index
      %151 = vector.load %arg8[%c10_243, %c16_244, %c0_245, %c0_246] : memref<13x20x8x128xf32, #tpu.memory_space<vmem>>, vector<1x4x8x128xf32>
      %152 = vector.shape_cast %151 : vector<1x4x8x128xf32> to vector<4x8x128xf32>
      %153 = vector.shape_cast %150 : vector<4x8x128xf32> to vector<1x4x8x128xf32>
      tpu.vector_store %arg8[%c10_243, %c16_244, %c0_245, %c0_246], %153 {strides = array<i32>} : memref<13x20x8x128xf32, #tpu.memory_space<vmem>>, vector<1x4x8x128xf32>,
      %c0_247 = arith.constant 0 : index
      %c11 = arith.constant 11 : index
      %c0_248 = arith.constant 0 : index
      %154 = vector.load %arg7[%c0_247, %c11, %c0_248] : memref<20x20x128xf32, #tpu.memory_space<vmem>>, vector<8x8x128xf32>
      %c11_249 = arith.constant 11 : index
      %c0_250 = arith.constant 0 : index
      %c0_251 = arith.constant 0 : index
      %c0_252 = arith.constant 0 : index
      %155 = vector.load %arg8[%c11_249, %c0_250, %c0_251, %c0_252] : memref<13x20x8x128xf32, #tpu.memory_space<vmem>>, vector<1x8x8x128xf32>
      %156 = vector.shape_cast %155 : vector<1x8x8x128xf32> to vector<8x8x128xf32>
      %157 = vector.shape_cast %154 : vector<8x8x128xf32> to vector<1x8x8x128xf32>
      tpu.vector_store %arg8[%c11_249, %c0_250, %c0_251, %c0_252], %157 {strides = array<i32>} : memref<13x20x8x128xf32, #tpu.memory_space<vmem>>, vector<1x8x8x128xf32>,
      %c8_253 = arith.constant 8 : index
      %c11_254 = arith.constant 11 : index
      %c0_255 = arith.constant 0 : index
      %158 = vector.load %arg7[%c8_253, %c11_254, %c0_255] : memref<20x20x128xf32, #tpu.memory_space<vmem>>, vector<8x8x128xf32>
      %c11_256 = arith.constant 11 : index
      %c8_257 = arith.constant 8 : index
      %c0_258 = arith.constant 0 : index
      %c0_259 = arith.constant 0 : index
      %159 = vector.load %arg8[%c11_256, %c8_257, %c0_258, %c0_259] : memref<13x20x8x128xf32, #tpu.memory_space<vmem>>, vector<1x8x8x128xf32>
      %160 = vector.shape_cast %159 : vector<1x8x8x128xf32> to vector<8x8x128xf32>
      %161 = vector.shape_cast %158 : vector<8x8x128xf32> to vector<1x8x8x128xf32>
      tpu.vector_store %arg8[%c11_256, %c8_257, %c0_258, %c0_259], %161 {strides = array<i32>} : memref<13x20x8x128xf32, #tpu.memory_space<vmem>>, vector<1x8x8x128xf32>,
      %c16_260 = arith.constant 16 : index
      %c11_261 = arith.constant 11 : index
      %c0_262 = arith.constant 0 : index
      %162 = vector.load %arg7[%c16_260, %c11_261, %c0_262] : memref<20x20x128xf32, #tpu.memory_space<vmem>>, vector<4x8x128xf32>
      %c11_263 = arith.constant 11 : index
      %c16_264 = arith.constant 16 : index
      %c0_265 = arith.constant 0 : index
      %c0_266 = arith.constant 0 : index
      %163 = vector.load %arg8[%c11_263, %c16_264, %c0_265, %c0_266] : memref<13x20x8x128xf32, #tpu.memory_space<vmem>>, vector<1x4x8x128xf32>
      %164 = vector.shape_cast %163 : vector<1x4x8x128xf32> to vector<4x8x128xf32>
      %165 = vector.shape_cast %162 : vector<4x8x128xf32> to vector<1x4x8x128xf32>
      tpu.vector_store %arg8[%c11_263, %c16_264, %c0_265, %c0_266], %165 {strides = array<i32>} : memref<13x20x8x128xf32, #tpu.memory_space<vmem>>, vector<1x4x8x128xf32>,
      %c0_267 = arith.constant 0 : index
      %c12 = arith.constant 12 : index
      %c0_268 = arith.constant 0 : index
      %166 = vector.load %arg7[%c0_267, %c12, %c0_268] : memref<20x20x128xf32, #tpu.memory_space<vmem>>, vector<8x8x128xf32>
      %c12_269 = arith.constant 12 : index
      %c0_270 = arith.constant 0 : index
      %c0_271 = arith.constant 0 : index
      %c0_272 = arith.constant 0 : index
      %167 = vector.load %arg8[%c12_269, %c0_270, %c0_271, %c0_272] : memref<13x20x8x128xf32, #tpu.memory_space<vmem>>, vector<1x8x8x128xf32>
      %168 = vector.shape_cast %167 : vector<1x8x8x128xf32> to vector<8x8x128xf32>
      %169 = vector.shape_cast %166 : vector<8x8x128xf32> to vector<1x8x8x128xf32>
      tpu.vector_store %arg8[%c12_269, %c0_270, %c0_271, %c0_272], %169 {strides = array<i32>} : memref<13x20x8x128xf32, #tpu.memory_space<vmem>>, vector<1x8x8x128xf32>,
      %c8_273 = arith.constant 8 : index
      %c12_274 = arith.constant 12 : index
      %c0_275 = arith.constant 0 : index
      %170 = vector.load %arg7[%c8_273, %c12_274, %c0_275] : memref<20x20x128xf32, #tpu.memory_space<vmem>>, vector<8x8x128xf32>
      %c12_276 = arith.constant 12 : index
      %c8_277 = arith.constant 8 : index
      %c0_278 = arith.constant 0 : index
      %c0_279 = arith.constant 0 : index
      %171 = vector.load %arg8[%c12_276, %c8_277, %c0_278, %c0_279] : memref<13x20x8x128xf32, #tpu.memory_space<vmem>>, vector<1x8x8x128xf32>
      %172 = vector.shape_cast %171 : vector<1x8x8x128xf32> to vector<8x8x128xf32>
      %173 = vector.shape_cast %170 : vector<8x8x128xf32> to vector<1x8x8x128xf32>
      tpu.vector_store %arg8[%c12_276, %c8_277, %c0_278, %c0_279], %173 {strides = array<i32>} : memref<13x20x8x128xf32, #tpu.memory_space<vmem>>, vector<1x8x8x128xf32>,
      %c16_280 = arith.constant 16 : index
      %c12_281 = arith.constant 12 : index
      %c0_282 = arith.constant 0 : index
      %174 = vector.load %arg7[%c16_280, %c12_281, %c0_282] : memref<20x20x128xf32, #tpu.memory_space<vmem>>, vector<4x8x128xf32>
      %c12_283 = arith.constant 12 : index
      %c16_284 = arith.constant 16 : index
      %c0_285 = arith.constant 0 : index
      %c0_286 = arith.constant 0 : index
      %175 = vector.load %arg8[%c12_283, %c16_284, %c0_285, %c0_286] : memref<13x20x8x128xf32, #tpu.memory_space<vmem>>, vector<1x4x8x128xf32>
      %176 = vector.shape_cast %175 : vector<1x4x8x128xf32> to vector<4x8x128xf32>
      %177 = vector.shape_cast %174 : vector<4x8x128xf32> to vector<1x4x8x128xf32>
      tpu.vector_store %arg8[%c12_283, %c16_284, %c0_285, %c0_286], %177 {strides = array<i32>} : memref<13x20x8x128xf32, #tpu.memory_space<vmem>>, vector<1x4x8x128xf32>,
    } else {
    }
    %c8_i32 = arith.constant 8 : i32
    %3 = arith.muli %arg2, %c8_i32 : i32
    %c0 = arith.constant 0 : index
    %c0_1 = arith.constant 0 : index
    %4 = vector.load %arg5[%c0, %c0_1] : memref<1x128xf32, #tpu.memory_space<vmem>>, vector<1x128xf32>
    %5 = vector.shape_cast %4 : vector<1x128xf32> to vector<128xf32>
    %6 = vector.shape_cast %5 : vector<128xf32> to vector<1x1x128xf32>
    %7 = vector.broadcast %6 : vector<1x1x128xf32> to vector<8x8x128xf32>
    %c0_i32_2 = arith.constant 0 : i32
    %c13_i32 = arith.constant 13 : i32
    %8 = arith.addi %c0_i32_2, %c13_i32 : i32
    %c1_i32 = arith.constant 1 : i32
    %9 = scf.for %arg9 = %c0_i32_2 to %8 step %c1_i32 iter_args(%arg10 = %7) -> (vector<8x8x128xf32>)  : i32 {
      %13 = arith.index_cast %arg9 : i32 to index
      %c0_8 = arith.constant 0 : index
      %c0_9 = arith.constant 0 : index
      %14 = vector.load %arg4[%13, %c0_8, %c0_9] : memref<13x13x128xf32, #tpu.memory_space<vmem>>, vector<1x13x128xf32>
      %15 = vector.shape_cast %14 : vector<1x13x128xf32> to vector<13x128xf32>
      %c0_i32_10 = arith.constant 0 : i32
      %16 = arith.addi %3, %c0_i32_10 : i32
      %c0_i32_11 = arith.constant 0 : i32
      %c0_i32_12 = arith.constant 0 : i32
      %c0_i32_13 = arith.constant 0 : i32
      %17 = tpu.memref_slice %arg8[%arg9, %c0_i32_11, %c0_i32_12, %c0_i32_13] : memref<13x20x8x128xf32, #tpu.memory_space<vmem>> -> memref<1x20x8x128xf32, #tpu.memory_space<vmem>>
      %18 = tpu.memref_squeeze %17 : memref<1x20x8x128xf32, #tpu.memory_space<vmem>> -> memref<20x8x128xf32, #tpu.memory_space<vmem>>
      %19 = arith.index_cast %16 : i32 to index
      %c0_14 = arith.constant 0 : index
      %c0_15 = arith.constant 0 : index
      %20 = vector.load %18[%19, %c0_14, %c0_15] : memref<20x8x128xf32, #tpu.memory_space<vmem>>, vector<8x8x128xf32>
      %21 = vector.extract_strided_slice %15 {offsets = [0, 0], sizes = [1, 128], strides = [1, 1]} : vector<13x128xf32> to vector<1x128xf32>
      %22 = vector.shape_cast %21 : vector<1x128xf32> to vector<128xf32>
      %23 = vector.shape_cast %22 : vector<128xf32> to vector<1x1x128xf32>
      %24 = vector.broadcast %23 : vector<1x1x128xf32> to vector<8x8x128xf32>
      %25 = arith.mulf %20, %24 : vector<8x8x128xf32>
      %26 = arith.addf %arg10, %25 : vector<8x8x128xf32>
      %c1_i32_16 = arith.constant 1 : i32
      %27 = arith.addi %3, %c1_i32_16 : i32
      %c0_i32_17 = arith.constant 0 : i32
      %c0_i32_18 = arith.constant 0 : i32
      %c0_i32_19 = arith.constant 0 : i32
      %28 = tpu.memref_slice %arg8[%arg9, %c0_i32_17, %c0_i32_18, %c0_i32_19] : memref<13x20x8x128xf32, #tpu.memory_space<vmem>> -> memref<1x20x8x128xf32, #tpu.memory_space<vmem>>
      %29 = tpu.memref_squeeze %28 : memref<1x20x8x128xf32, #tpu.memory_space<vmem>> -> memref<20x8x128xf32, #tpu.memory_space<vmem>>
      %30 = arith.index_cast %27 : i32 to index
      %c0_20 = arith.constant 0 : index
      %c0_21 = arith.constant 0 : index
      %31 = vector.load %29[%30, %c0_20, %c0_21] : memref<20x8x128xf32, #tpu.memory_space<vmem>>, vector<8x8x128xf32>
      %32 = vector.extract_strided_slice %15 {offsets = [1, 0], sizes = [1, 128], strides = [1, 1]} : vector<13x128xf32> to vector<1x128xf32>
      %33 = vector.shape_cast %32 : vector<1x128xf32> to vector<128xf32>
      %34 = vector.shape_cast %33 : vector<128xf32> to vector<1x1x128xf32>
      %35 = vector.broadcast %34 : vector<1x1x128xf32> to vector<8x8x128xf32>
      %36 = arith.mulf %31, %35 : vector<8x8x128xf32>
      %37 = arith.addf %26, %36 : vector<8x8x128xf32>
      %c2_i32 = arith.constant 2 : i32
      %38 = arith.addi %3, %c2_i32 : i32
      %c0_i32_22 = arith.constant 0 : i32
      %c0_i32_23 = arith.constant 0 : i32
      %c0_i32_24 = arith.constant 0 : i32
      %39 = tpu.memref_slice %arg8[%arg9, %c0_i32_22, %c0_i32_23, %c0_i32_24] : memref<13x20x8x128xf32, #tpu.memory_space<vmem>> -> memref<1x20x8x128xf32, #tpu.memory_space<vmem>>
      %40 = tpu.memref_squeeze %39 : memref<1x20x8x128xf32, #tpu.memory_space<vmem>> -> memref<20x8x128xf32, #tpu.memory_space<vmem>>
      %41 = arith.index_cast %38 : i32 to index
      %c0_25 = arith.constant 0 : index
      %c0_26 = arith.constant 0 : index
      %42 = vector.load %40[%41, %c0_25, %c0_26] : memref<20x8x128xf32, #tpu.memory_space<vmem>>, vector<8x8x128xf32>
      %43 = vector.extract_strided_slice %15 {offsets = [2, 0], sizes = [1, 128], strides = [1, 1]} : vector<13x128xf32> to vector<1x128xf32>
      %44 = vector.shape_cast %43 : vector<1x128xf32> to vector<128xf32>
      %45 = vector.shape_cast %44 : vector<128xf32> to vector<1x1x128xf32>
      %46 = vector.broadcast %45 : vector<1x1x128xf32> to vector<8x8x128xf32>
      %47 = arith.mulf %42, %46 : vector<8x8x128xf32>
      %48 = arith.addf %37, %47 : vector<8x8x128xf32>
      %c3_i32 = arith.constant 3 : i32
      %49 = arith.addi %3, %c3_i32 : i32
      %c0_i32_27 = arith.constant 0 : i32
      %c0_i32_28 = arith.constant 0 : i32
      %c0_i32_29 = arith.constant 0 : i32
      %50 = tpu.memref_slice %arg8[%arg9, %c0_i32_27, %c0_i32_28, %c0_i32_29] : memref<13x20x8x128xf32, #tpu.memory_space<vmem>> -> memref<1x20x8x128xf32, #tpu.memory_space<vmem>>
      %51 = tpu.memref_squeeze %50 : memref<1x20x8x128xf32, #tpu.memory_space<vmem>> -> memref<20x8x128xf32, #tpu.memory_space<vmem>>
      %52 = arith.index_cast %49 : i32 to index
      %c0_30 = arith.constant 0 : index
      %c0_31 = arith.constant 0 : index
      %53 = vector.load %51[%52, %c0_30, %c0_31] : memref<20x8x128xf32, #tpu.memory_space<vmem>>, vector<8x8x128xf32>
      %54 = vector.extract_strided_slice %15 {offsets = [3, 0], sizes = [1, 128], strides = [1, 1]} : vector<13x128xf32> to vector<1x128xf32>
      %55 = vector.shape_cast %54 : vector<1x128xf32> to vector<128xf32>
      %56 = vector.shape_cast %55 : vector<128xf32> to vector<1x1x128xf32>
      %57 = vector.broadcast %56 : vector<1x1x128xf32> to vector<8x8x128xf32>
      %58 = arith.mulf %53, %57 : vector<8x8x128xf32>
      %59 = arith.addf %48, %58 : vector<8x8x128xf32>
      %c4_i32 = arith.constant 4 : i32
      %60 = arith.addi %3, %c4_i32 : i32
      %c0_i32_32 = arith.constant 0 : i32
      %c0_i32_33 = arith.constant 0 : i32
      %c0_i32_34 = arith.constant 0 : i32
      %61 = tpu.memref_slice %arg8[%arg9, %c0_i32_32, %c0_i32_33, %c0_i32_34] : memref<13x20x8x128xf32, #tpu.memory_space<vmem>> -> memref<1x20x8x128xf32, #tpu.memory_space<vmem>>
      %62 = tpu.memref_squeeze %61 : memref<1x20x8x128xf32, #tpu.memory_space<vmem>> -> memref<20x8x128xf32, #tpu.memory_space<vmem>>
      %63 = arith.index_cast %60 : i32 to index
      %c0_35 = arith.constant 0 : index
      %c0_36 = arith.constant 0 : index
      %64 = vector.load %62[%63, %c0_35, %c0_36] : memref<20x8x128xf32, #tpu.memory_space<vmem>>, vector<8x8x128xf32>
      %65 = vector.extract_strided_slice %15 {offsets = [4, 0], sizes = [1, 128], strides = [1, 1]} : vector<13x128xf32> to vector<1x128xf32>
      %66 = vector.shape_cast %65 : vector<1x128xf32> to vector<128xf32>
      %67 = vector.shape_cast %66 : vector<128xf32> to vector<1x1x128xf32>
      %68 = vector.broadcast %67 : vector<1x1x128xf32> to vector<8x8x128xf32>
      %69 = arith.mulf %64, %68 : vector<8x8x128xf32>
      %70 = arith.addf %59, %69 : vector<8x8x128xf32>
      %c5_i32 = arith.constant 5 : i32
      %71 = arith.addi %3, %c5_i32 : i32
      %c0_i32_37 = arith.constant 0 : i32
      %c0_i32_38 = arith.constant 0 : i32
      %c0_i32_39 = arith.constant 0 : i32
      %72 = tpu.memref_slice %arg8[%arg9, %c0_i32_37, %c0_i32_38, %c0_i32_39] : memref<13x20x8x128xf32, #tpu.memory_space<vmem>> -> memref<1x20x8x128xf32, #tpu.memory_space<vmem>>
      %73 = tpu.memref_squeeze %72 : memref<1x20x8x128xf32, #tpu.memory_space<vmem>> -> memref<20x8x128xf32, #tpu.memory_space<vmem>>
      %74 = arith.index_cast %71 : i32 to index
      %c0_40 = arith.constant 0 : index
      %c0_41 = arith.constant 0 : index
      %75 = vector.load %73[%74, %c0_40, %c0_41] : memref<20x8x128xf32, #tpu.memory_space<vmem>>, vector<8x8x128xf32>
      %76 = vector.extract_strided_slice %15 {offsets = [5, 0], sizes = [1, 128], strides = [1, 1]} : vector<13x128xf32> to vector<1x128xf32>
      %77 = vector.shape_cast %76 : vector<1x128xf32> to vector<128xf32>
      %78 = vector.shape_cast %77 : vector<128xf32> to vector<1x1x128xf32>
      %79 = vector.broadcast %78 : vector<1x1x128xf32> to vector<8x8x128xf32>
      %80 = arith.mulf %75, %79 : vector<8x8x128xf32>
      %81 = arith.addf %70, %80 : vector<8x8x128xf32>
      %c6_i32 = arith.constant 6 : i32
      %82 = arith.addi %3, %c6_i32 : i32
      %c0_i32_42 = arith.constant 0 : i32
      %c0_i32_43 = arith.constant 0 : i32
      %c0_i32_44 = arith.constant 0 : i32
      %83 = tpu.memref_slice %arg8[%arg9, %c0_i32_42, %c0_i32_43, %c0_i32_44] : memref<13x20x8x128xf32, #tpu.memory_space<vmem>> -> memref<1x20x8x128xf32, #tpu.memory_space<vmem>>
      %84 = tpu.memref_squeeze %83 : memref<1x20x8x128xf32, #tpu.memory_space<vmem>> -> memref<20x8x128xf32, #tpu.memory_space<vmem>>
      %85 = arith.index_cast %82 : i32 to index
      %c0_45 = arith.constant 0 : index
      %c0_46 = arith.constant 0 : index
      %86 = vector.load %84[%85, %c0_45, %c0_46] : memref<20x8x128xf32, #tpu.memory_space<vmem>>, vector<8x8x128xf32>
      %87 = vector.extract_strided_slice %15 {offsets = [6, 0], sizes = [1, 128], strides = [1, 1]} : vector<13x128xf32> to vector<1x128xf32>
      %88 = vector.shape_cast %87 : vector<1x128xf32> to vector<128xf32>
      %89 = vector.shape_cast %88 : vector<128xf32> to vector<1x1x128xf32>
      %90 = vector.broadcast %89 : vector<1x1x128xf32> to vector<8x8x128xf32>
      %91 = arith.mulf %86, %90 : vector<8x8x128xf32>
      %92 = arith.addf %81, %91 : vector<8x8x128xf32>
      %c7_i32 = arith.constant 7 : i32
      %93 = arith.addi %3, %c7_i32 : i32
      %c0_i32_47 = arith.constant 0 : i32
      %c0_i32_48 = arith.constant 0 : i32
      %c0_i32_49 = arith.constant 0 : i32
      %94 = tpu.memref_slice %arg8[%arg9, %c0_i32_47, %c0_i32_48, %c0_i32_49] : memref<13x20x8x128xf32, #tpu.memory_space<vmem>> -> memref<1x20x8x128xf32, #tpu.memory_space<vmem>>
      %95 = tpu.memref_squeeze %94 : memref<1x20x8x128xf32, #tpu.memory_space<vmem>> -> memref<20x8x128xf32, #tpu.memory_space<vmem>>
      %96 = arith.index_cast %93 : i32 to index
      %c0_50 = arith.constant 0 : index
      %c0_51 = arith.constant 0 : index
      %97 = vector.load %95[%96, %c0_50, %c0_51] : memref<20x8x128xf32, #tpu.memory_space<vmem>>, vector<8x8x128xf32>
      %98 = vector.extract_strided_slice %15 {offsets = [7, 0], sizes = [1, 128], strides = [1, 1]} : vector<13x128xf32> to vector<1x128xf32>
      %99 = vector.shape_cast %98 : vector<1x128xf32> to vector<128xf32>
      %100 = vector.shape_cast %99 : vector<128xf32> to vector<1x1x128xf32>
      %101 = vector.broadcast %100 : vector<1x1x128xf32> to vector<8x8x128xf32>
      %102 = arith.mulf %97, %101 : vector<8x8x128xf32>
      %103 = arith.addf %92, %102 : vector<8x8x128xf32>
      %c8_i32_52 = arith.constant 8 : i32
      %104 = arith.addi %3, %c8_i32_52 : i32
      %c0_i32_53 = arith.constant 0 : i32
      %c0_i32_54 = arith.constant 0 : i32
      %c0_i32_55 = arith.constant 0 : i32
      %105 = tpu.memref_slice %arg8[%arg9, %c0_i32_53, %c0_i32_54, %c0_i32_55] : memref<13x20x8x128xf32, #tpu.memory_space<vmem>> -> memref<1x20x8x128xf32, #tpu.memory_space<vmem>>
      %106 = tpu.memref_squeeze %105 : memref<1x20x8x128xf32, #tpu.memory_space<vmem>> -> memref<20x8x128xf32, #tpu.memory_space<vmem>>
      %107 = arith.index_cast %104 : i32 to index
      %c0_56 = arith.constant 0 : index
      %c0_57 = arith.constant 0 : index
      %108 = vector.load %106[%107, %c0_56, %c0_57] : memref<20x8x128xf32, #tpu.memory_space<vmem>>, vector<8x8x128xf32>
      %109 = vector.extract_strided_slice %15 {offsets = [8, 0], sizes = [1, 128], strides = [1, 1]} : vector<13x128xf32> to vector<1x128xf32>
      %110 = vector.shape_cast %109 : vector<1x128xf32> to vector<128xf32>
      %111 = vector.shape_cast %110 : vector<128xf32> to vector<1x1x128xf32>
      %112 = vector.broadcast %111 : vector<1x1x128xf32> to vector<8x8x128xf32>
      %113 = arith.mulf %108, %112 : vector<8x8x128xf32>
      %114 = arith.addf %103, %113 : vector<8x8x128xf32>
      %c9_i32 = arith.constant 9 : i32
      %115 = arith.addi %3, %c9_i32 : i32
      %c0_i32_58 = arith.constant 0 : i32
      %c0_i32_59 = arith.constant 0 : i32
      %c0_i32_60 = arith.constant 0 : i32
      %116 = tpu.memref_slice %arg8[%arg9, %c0_i32_58, %c0_i32_59, %c0_i32_60] : memref<13x20x8x128xf32, #tpu.memory_space<vmem>> -> memref<1x20x8x128xf32, #tpu.memory_space<vmem>>
      %117 = tpu.memref_squeeze %116 : memref<1x20x8x128xf32, #tpu.memory_space<vmem>> -> memref<20x8x128xf32, #tpu.memory_space<vmem>>
      %118 = arith.index_cast %115 : i32 to index
      %c0_61 = arith.constant 0 : index
      %c0_62 = arith.constant 0 : index
      %119 = vector.load %117[%118, %c0_61, %c0_62] : memref<20x8x128xf32, #tpu.memory_space<vmem>>, vector<8x8x128xf32>
      %120 = vector.extract_strided_slice %15 {offsets = [9, 0], sizes = [1, 128], strides = [1, 1]} : vector<13x128xf32> to vector<1x128xf32>
      %121 = vector.shape_cast %120 : vector<1x128xf32> to vector<128xf32>
      %122 = vector.shape_cast %121 : vector<128xf32> to vector<1x1x128xf32>
      %123 = vector.broadcast %122 : vector<1x1x128xf32> to vector<8x8x128xf32>
      %124 = arith.mulf %119, %123 : vector<8x8x128xf32>
      %125 = arith.addf %114, %124 : vector<8x8x128xf32>
      %c10_i32 = arith.constant 10 : i32
      %126 = arith.addi %3, %c10_i32 : i32
      %c0_i32_63 = arith.constant 0 : i32
      %c0_i32_64 = arith.constant 0 : i32
      %c0_i32_65 = arith.constant 0 : i32
      %127 = tpu.memref_slice %arg8[%arg9, %c0_i32_63, %c0_i32_64, %c0_i32_65] : memref<13x20x8x128xf32, #tpu.memory_space<vmem>> -> memref<1x20x8x128xf32, #tpu.memory_space<vmem>>
      %128 = tpu.memref_squeeze %127 : memref<1x20x8x128xf32, #tpu.memory_space<vmem>> -> memref<20x8x128xf32, #tpu.memory_space<vmem>>
      %129 = arith.index_cast %126 : i32 to index
      %c0_66 = arith.constant 0 : index
      %c0_67 = arith.constant 0 : index
      %130 = vector.load %128[%129, %c0_66, %c0_67] : memref<20x8x128xf32, #tpu.memory_space<vmem>>, vector<8x8x128xf32>
      %131 = vector.extract_strided_slice %15 {offsets = [10, 0], sizes = [1, 128], strides = [1, 1]} : vector<13x128xf32> to vector<1x128xf32>
      %132 = vector.shape_cast %131 : vector<1x128xf32> to vector<128xf32>
      %133 = vector.shape_cast %132 : vector<128xf32> to vector<1x1x128xf32>
      %134 = vector.broadcast %133 : vector<1x1x128xf32> to vector<8x8x128xf32>
      %135 = arith.mulf %130, %134 : vector<8x8x128xf32>
      %136 = arith.addf %125, %135 : vector<8x8x128xf32>
      %c11_i32 = arith.constant 11 : i32
      %137 = arith.addi %3, %c11_i32 : i32
      %c0_i32_68 = arith.constant 0 : i32
      %c0_i32_69 = arith.constant 0 : i32
      %c0_i32_70 = arith.constant 0 : i32
      %138 = tpu.memref_slice %arg8[%arg9, %c0_i32_68, %c0_i32_69, %c0_i32_70] : memref<13x20x8x128xf32, #tpu.memory_space<vmem>> -> memref<1x20x8x128xf32, #tpu.memory_space<vmem>>
      %139 = tpu.memref_squeeze %138 : memref<1x20x8x128xf32, #tpu.memory_space<vmem>> -> memref<20x8x128xf32, #tpu.memory_space<vmem>>
      %140 = arith.index_cast %137 : i32 to index
      %c0_71 = arith.constant 0 : index
      %c0_72 = arith.constant 0 : index
      %141 = vector.load %139[%140, %c0_71, %c0_72] : memref<20x8x128xf32, #tpu.memory_space<vmem>>, vector<8x8x128xf32>
      %142 = vector.extract_strided_slice %15 {offsets = [11, 0], sizes = [1, 128], strides = [1, 1]} : vector<13x128xf32> to vector<1x128xf32>
      %143 = vector.shape_cast %142 : vector<1x128xf32> to vector<128xf32>
      %144 = vector.shape_cast %143 : vector<128xf32> to vector<1x1x128xf32>
      %145 = vector.broadcast %144 : vector<1x1x128xf32> to vector<8x8x128xf32>
      %146 = arith.mulf %141, %145 : vector<8x8x128xf32>
      %147 = arith.addf %136, %146 : vector<8x8x128xf32>
      %c12_i32 = arith.constant 12 : i32
      %148 = arith.addi %3, %c12_i32 : i32
      %c0_i32_73 = arith.constant 0 : i32
      %c0_i32_74 = arith.constant 0 : i32
      %c0_i32_75 = arith.constant 0 : i32
      %149 = tpu.memref_slice %arg8[%arg9, %c0_i32_73, %c0_i32_74, %c0_i32_75] : memref<13x20x8x128xf32, #tpu.memory_space<vmem>> -> memref<1x20x8x128xf32, #tpu.memory_space<vmem>>
      %150 = tpu.memref_squeeze %149 : memref<1x20x8x128xf32, #tpu.memory_space<vmem>> -> memref<20x8x128xf32, #tpu.memory_space<vmem>>
      %151 = arith.index_cast %148 : i32 to index
      %c0_76 = arith.constant 0 : index
      %c0_77 = arith.constant 0 : index
      %152 = vector.load %150[%151, %c0_76, %c0_77] : memref<20x8x128xf32, #tpu.memory_space<vmem>>, vector<8x8x128xf32>
      %153 = vector.extract_strided_slice %15 {offsets = [12, 0], sizes = [1, 128], strides = [1, 1]} : vector<13x128xf32> to vector<1x128xf32>
      %154 = vector.shape_cast %153 : vector<1x128xf32> to vector<128xf32>
      %155 = vector.shape_cast %154 : vector<128xf32> to vector<1x1x128xf32>
      %156 = vector.broadcast %155 : vector<1x1x128xf32> to vector<8x8x128xf32>
      %157 = arith.mulf %152, %156 : vector<8x8x128xf32>
      %158 = arith.addf %147, %157 : vector<8x8x128xf32>
      scf.yield %158 : vector<8x8x128xf32>
    }
    %c13_i32_3 = arith.constant 13 : i32
    %c0_4 = arith.constant 0 : index
    %c0_5 = arith.constant 0 : index
    %c0_6 = arith.constant 0 : index
    %c0_7 = arith.constant 0 : index
    %10 = vector.load %arg6[%c0_4, %c0_5, %c0_6, %c0_7] : memref<1x8x8x128xf32, #tpu.memory_space<vmem>>, vector<1x8x8x128xf32>
    %11 = vector.shape_cast %10 : vector<1x8x8x128xf32> to vector<8x8x128xf32>
    %12 = vector.shape_cast %9 : vector<8x8x128xf32> to vector<1x8x8x128xf32>
    tpu.vector_store %arg6[%c0_4, %c0_5, %c0_6, %c0_7], %12 {strides = array<i32>} : memref<1x8x8x128xf32, #tpu.memory_space<vmem>>, vector<1x8x8x128xf32>,
    return
  }
  func.func @transform_0(%arg0: i32, %arg1: i32, %arg2: i32) -> (i32, i32, i32, i32) {
    %c0_i32 = arith.constant 0 : i32
    %c0_i32_0 = arith.constant 0 : i32
    %c0_i32_1 = arith.constant 0 : i32
    return %arg0, %c0_i32, %c0_i32_0, %arg1 : i32, i32, i32, i32
  }
  func.func @transform_1(%arg0: i32, %arg1: i32, %arg2: i32) -> (i32, i32, i32) {
    %c0_i32 = arith.constant 0 : i32
    %c0_i32_0 = arith.constant 0 : i32
    %c0_i32_1 = arith.constant 0 : i32
    return %c0_i32, %c0_i32_0, %arg1 : i32, i32, i32
  }
  func.func @transform_2(%arg0: i32, %arg1: i32, %arg2: i32) -> (i32, i32) {
    %c0_i32 = arith.constant 0 : i32
    %c0_i32_0 = arith.constant 0 : i32
    return %c0_i32, %arg1 : i32, i32
  }
  func.func @transform_3(%arg0: i32, %arg1: i32, %arg2: i32) -> (i32, i32, i32, i32) {
    %c0_i32 = arith.constant 0 : i32
    %c0_i32_0 = arith.constant 0 : i32
    return %arg0, %arg2, %c0_i32, %arg1 : i32, i32, i32, i32
  }
}

</mosaic_0001>

<llo_original>
// kernel: tpu_custom_call.1
$region0: #{tpu_custom_call.1}
  #allocation0 [shape = 'u32[]', space=smem, size = 0x4, offset = 0x4, fixed_abs, tag = 'smem constant byte address 0x4 - core index']
  #allocation1 [shape = 'u32[144,128]{1,0:T(1,128)}', space=vmem, size = 0x12000, scoped, tag = 'internal scratch']
  #allocation2 [shape = 'f32[20,20,128]{2,1,0:T(8,128)}', space=vmem, size = 0x3c000, scoped, tag = 'scratch operand']
  #allocation3 [shape = 'f32[13,20,8,128]{3,2,1,0:T(8,128)}', space=vmem, size = 0x104000, scoped, tag = 'scratch operand']
  %s0 = inlined_call_operand.hbm [shape: f32[2,8,8,128], index: 0, kind: input, shape index: {}]
  %s1 = inlined_call_operand.hbm [shape: f32[13,13,128], index: 1, kind: input, shape index: {}]
  %s2 = inlined_call_operand.vmem [shape: f32[1,128], index: 2, kind: input, shape index: {}]
  %s3 = inlined_call_operand.hbm [shape: f32[2,8,8,128], index: 3, kind: output, shape index: {}]
  %s4 = sld [smem:[#allocation0]]
  $region64: #{tpu_custom_call.1} parent=0
    _
  %s6 = ssub.s32 1, %s4
  %s7 = scalar_select 0, %s6, %s4
  $region1: #{tpu_custom_call.1} parent=0
    #allocation4 [shape = 'u8[65536]{0}', space=vmem, size = 0x10000, scoped, tag = 'input window, operand 0']
    #allocation5 [shape = 's32[2]{0}', space=sflag, size = 0x8, scoped, tag = 'scoped memory for tpu_custom_call.1']
    #allocation6 [shape = 's32[2]{0}', space=sflag, size = 0x8, scoped, tag = 'scoped memory for tpu_custom_call.1']
    #allocation7 [shape = 'u8[106496]{0}', space=vmem, size = 0x1a000, scoped, tag = 'input window, operand 1, single buffered']
    #allocation8 [shape = 's32[1]{0}', space=sflag, size = 0x4, scoped, tag = 'scoped memory for tpu_custom_call.1']
    #allocation9 [shape = 'u8[65536]{0}', space=vmem, size = 0x10000, scoped, tag = 'output window, operand 0']
    %8 = vsyncpa [#allocation5], 0
    %s9 = scalar_lea.sflag [#allocation5], 1
    %10 = vsyncpa %s9, 0
    %11 = vsyncpa [#allocation8], 0
    %12 = vsyncpa [#allocation6], 0
    %s13 = scalar_lea.sflag [#allocation6], 1
    %14 = vsyncpa %s13, 0
    loop: start=0, step=1, limit=4
    $region2: #{tpu_custom_call.1} parent=1 // loop_pre_header
      _
    $region3: #{tpu_custom_call.1} parent=1 // loop_header
      %s16 = sphi 0, %s20
      %p17 = scmp.ge.s32.totalorder %s16, 4
      %s23 = sphi 0, %s42
      %s24 = sphi 0, %s38
      %s25 = sphi 0, %s34
      %s26 = sphi 0, %s23
      %s27 = sphi 0, %s24
      %s28 = sphi 0, %s25
      %s29 = sphi 0, %s26
      %s30 = sphi 0, %s27
      %s31 = sphi 0, %s28
      %s47 = sphi 0, %s49
      %s50 = sphi 0, %s47
      %s51 = sphi 0, %s50
      %s67 = sphi 0, %s51
      %s73 = sphi 0, %s75
      %s76 = sphi 0, %s73
      %s77 = sphi 0, %s76
      %s93 = sphi 0, %s77
      %s99 = sphi 0, %s101
      %s102 = sphi 0, %s99
      %s103 = sphi 0, %s102
      %s119 = sphi 0, %s103
      %s129 = sphi 0, %s131
      %s132 = sphi 0, %s129
      %s133 = sphi 0, %s132
      %s149 = sphi 0, %s133
    $region4: #{tpu_custom_call.1} parent=1 // loop_header_branch
      %19 = sbr.rel (%p17) target = $region8
    $region5: #{tpu_custom_call.1} parent=1 // loop_body
      %s21 = ssub.s32 %s16, 1
      %s22 = ssub.s32 %s16, 2
      %s32 = sadd.s32 1, %s25
      %p33 = scmp.ge.s32.totalorder %s32, 1
      %s34 = scalar_select %p33, 0, %s32
      %s35 = sadd.s32 1, %s24
      %s36 = scalar_select %p33, %s35, %s24
      %p37 = scmp.ge.s32.totalorder %s36, 1
      %s38 = scalar_select %p37, 0, %s36
      %s39 = sadd.s32 1, %s23
      %s40 = scalar_select %p37, %s39, %s23
      %p41 = scmp.ge.s32.totalorder %s40, 2
      %s42 = scalar_select %p41, 0, %s40
      %s43 = ssub.s32 %s23, %s42
      %s44 = ssub.s32 %s24, %s38
      %s45 = sor.u32 %s43, %s44
      %p46 = scmp.eq.s32.totalorder %s45, 0
      %s48 = sadd.s32 %s47, 1
      %s49 = scalar_select %p46, %s47, %s48
      %p52 = pneg %p46
      %p53 = scmp.eq.s32.totalorder %s16, 1
      %p54 = por %p52, %p53
      %p55 = scmp.ne.s32.totalorder %s47, %s50
      %p56 = scmp.eq.s32.totalorder %s16, 0
      %p57 = por %p55, %p56
      %p58 = scmp.ne.s32.totalorder %s47, %s50
      %p59 = scmp.eq.s32.totalorder %s21, 1
      %p60 = por %p58, %p59
      %p61 = scmp.ne.s32.totalorder %s50, %s51
      %p62 = scmp.eq.s32.totalorder %s21, 0
      %p63 = por %p61, %p62
      %p64 = scmp.ne.s32.totalorder %s50, %s51
      %p65 = scmp.eq.s32.totalorder %s22, 1
      %p66 = por %p64, %p65
      %p68 = scmp.ne.s32.totalorder %s51, %s67
      %p69 = scmp.eq.s32.totalorder %s22, 0
      %p70 = por %p68, %p69
      %s71 = ssub.s32 %s24, %s38
      %p72 = scmp.eq.s32.totalorder %s71, 0
      %s74 = sadd.s32 %s73, 1
      %s75 = scalar_select %p72, %s73, %s74
      %p78 = pneg %p72
      %p79 = scmp.eq.s32.totalorder %s16, 1
      %p80 = por %p78, %p79
      %p81 = scmp.ne.s32.totalorder %s73, %s76
      %p82 = scmp.eq.s32.totalorder %s16, 0
      %p83 = por %p81, %p82
      %p84 = scmp.ne.s32.totalorder %s73, %s76
      %p85 = scmp.eq.s32.totalorder %s21, 1
      %p86 = por %p84, %p85
      %p87 = scmp.ne.s32.totalorder %s76, %s77
      %p88 = scmp.eq.s32.totalorder %s21, 0
      %p89 = por %p87, %p88
      %p90 = scmp.ne.s32.totalorder %s76, %s77
      %p91 = scmp.eq.s32.totalorder %s22, 1
      %p92 = por %p90, %p91
      %p94 = scmp.ne.s32.totalorder %s77, %s93
      %p95 = scmp.eq.s32.totalorder %s22, 0
      %p96 = por %p94, %p95
      %s97 = ssub.s32 %s24, %s38
      %p98 = scmp.eq.s32.totalorder %s97, 0
      %s100 = sadd.s32 %s99, 1
      %s101 = scalar_select %p98, %s99, %s100
      %p104 = pneg %p98
      %p105 = scmp.eq.s32.totalorder %s16, 1
      %p106 = por %p104, %p105
      %p107 = scmp.ne.s32.totalorder %s99, %s102
      %p108 = scmp.eq.s32.totalorder %s16, 0
      %p109 = por %p107, %p108
      %p110 = scmp.ne.s32.totalorder %s99, %s102
      %p111 = scmp.eq.s32.totalorder %s21, 1
      %p112 = por %p110, %p111
      %p113 = scmp.ne.s32.totalorder %s102, %s103
      %p114 = scmp.eq.s32.totalorder %s21, 0
      %p115 = por %p113, %p114
      %p116 = scmp.ne.s32.totalorder %s102, %s103
      %p117 = scmp.eq.s32.totalorder %s22, 1
      %p118 = por %p116, %p117
      %p120 = scmp.ne.s32.totalorder %s103, %s119
      %p121 = scmp.eq.s32.totalorder %s22, 0
      %p122 = por %p120, %p121
      %s123 = ssub.s32 %s23, %s42
      %s124 = ssub.s32 %s25, %s34
      %s125 = sor.u32 %s123, %s124
      %s126 = ssub.s32 %s24, %s38
      %s127 = sor.u32 %s125, %s126
      %p128 = scmp.eq.s32.totalorder %s127, 0
      %s130 = sadd.s32 %s129, 1
      %s131 = scalar_select %p128, %s129, %s130
      %p134 = pneg %p128
      %p135 = scmp.eq.s32.totalorder %s16, 1
      %p136 = por %p134, %p135
      %p137 = scmp.ne.s32.totalorder %s129, %s132
      %p138 = scmp.eq.s32.totalorder %s16, 0
      %p139 = por %p137, %p138
      %p140 = scmp.ne.s32.totalorder %s129, %s132
      %p141 = scmp.eq.s32.totalorder %s21, 1
      %p142 = por %p140, %p141
      %p143 = scmp.ne.s32.totalorder %s132, %s133
      %p144 = scmp.eq.s32.totalorder %s21, 0
      %p145 = por %p143, %p144
      %p146 = scmp.ne.s32.totalorder %s132, %s133
      %p147 = scmp.eq.s32.totalorder %s22, 1
      %p148 = por %p146, %p147
      %p150 = scmp.ne.s32.totalorder %s133, %s149
      %p151 = scmp.eq.s32.totalorder %s22, 0
      %p152 = por %p150, %p151
      %p153 = scmp.le.s32.totalorder 1, %s16
      %p154 = scmp.lt.s32.totalorder %s16, 3
      %p155 = pnand %p153, %p154
      %p156 = pneg %p155
      // Predicated region
      $region9: #{tpu_custom_call.1} parent=5 // pred_check
        _
      $region10: #{tpu_custom_call.1} parent=5 // pred_check_branch
        %158 = sbr.rel (%p155) target = $region12
      $region11: #{tpu_custom_call.1} parent=5 // pred_region
        %s159 = ssub.s32 %s16, 1
        // Predicated region
        $region13: #{tpu_custom_call.1} parent=11 // pred_check
          %p160 = pneg %p89
        $region14: #{tpu_custom_call.1} parent=11 // pred_check_branch
          %162 = sbr.rel (%p160) target = $region16
        $region15: #{tpu_custom_call.1} parent=11 // pred_region
          %s164 = ssub.s32 3328, 3328
          %165 = vsyncadd [#allocation8], %s164
          %s166 = smul.addr %s27, 128
          %s167 = scalar_lea.hbm %s1, %s166
          %s168 = sshll.u32 [#allocation7], 4
          %s169 = int_to_ptr.vmem [resolvable:$true] %s168
          %174 = dma.hbm_to_vmem [thread:$0]  %s167, 3328, %s169, [#allocation8], 128, 128, 8
        $region16: #{tpu_custom_call.1} parent=11 // pred_fallthru
          _
        // Predicated region
        $region17: #{tpu_custom_call.1} parent=11 // pred_check
          %p175 = pneg %p115
        $region18: #{tpu_custom_call.1} parent=11 // pred_check_branch
          %177 = sbr.rel (%p175) target = $region20
        $region19: #{tpu_custom_call.1} parent=11 // pred_region
          %p178 = scmp.lt.s32.totalorder %s27, 0
          %s179 = scalar_select %p178, %s27, 0
          %s180 = scalar_lea.vmem %s2, %s179
        $region20: #{tpu_custom_call.1} parent=11 // pred_fallthru
          _
      $region12: #{tpu_custom_call.1} parent=5 // pred_fallthru
        _
      %p181 = scmp.lt.s32.totalorder %s16, 2
      // Predicated region
      $region21: #{tpu_custom_call.1} parent=5 // pred_check
        %p182 = pneg %p181
      $region22: #{tpu_custom_call.1} parent=5 // pred_check_branch
        %184 = sbr.rel (%p182) target = $region24
      $region23: #{tpu_custom_call.1} parent=5 // pred_region
        // Predicated region
        $region25: #{tpu_custom_call.1} parent=23 // pred_check
          %p185 = pneg %p57
        $region26: #{tpu_custom_call.1} parent=23 // pred_check_branch
          %187 = sbr.rel (%p185) target = $region28
        $region27: #{tpu_custom_call.1} parent=23 // pred_region
          %s188 = sand.u32 %s47, 1
          %s189 = scalar_lea.sflag [#allocation5], %s188
          %s190 = sand.u32 %s47, 1
          %s191 = smul.addr %s190, 64
          %s192 = scalar_lea.vmem [#allocation4], %s191
          %s194 = ssub.s32 1024, 1024
          %195 = vsyncadd %s189, %s194
          %s196 = smul.addr %s23, 8
          %s197 = sadd.s32 %s24, %s196
          %s198 = smul.addr %s197, 128
          %s199 = scalar_lea.hbm %s0, %s198
          %s200 = sshll.u32 %s192, 4
          %s201 = int_to_ptr.vmem [resolvable:$true] %s200
          %206 = dma.hbm_to_vmem [thread:$0]  %s199, 1024, %s201, %s189, 128, 128, 8
        $region28: #{tpu_custom_call.1} parent=23 // pred_fallthru
          _
      $region24: #{tpu_custom_call.1} parent=5 // pred_fallthru
        _
      %p207 = scmp.le.s32.totalorder 1, %s16
      %p208 = scmp.lt.s32.totalorder %s16, 3
      %p209 = pnand %p207, %p208
      %p210 = pneg %p209
      // Predicated region
      $region29: #{tpu_custom_call.1} parent=5 // pred_check
        _
      $region30: #{tpu_custom_call.1} parent=5 // pred_check_branch
        %212 = sbr.rel (%p209) target = $region32
      $region31: #{tpu_custom_call.1} parent=5 // pred_region
        %s213 = ssub.s32 %s16, 1
        %s214 = sand.u32 %s50, 1
        %s215 = scalar_lea.sflag [#allocation5], %s214
        %s216 = sand.u32 %s50, 1
        %s217 = smul.addr %s216, 64
        %s218 = scalar_lea.vmem [#allocation4], %s217
        // Predicated region
        $region33: #{tpu_custom_call.1} parent=31 // pred_check
          %p219 = pneg %p63
        $region34: #{tpu_custom_call.1} parent=31 // pred_check_branch
          %221 = sbr.rel (%p219) target = $region36
        $region35: #{tpu_custom_call.1} parent=31 // pred_region
          %222 = dma.done %s215, 1024
        $region36: #{tpu_custom_call.1} parent=31 // pred_fallthru
          _
        // Predicated region
        $region37: #{tpu_custom_call.1} parent=31 // pred_check
          %p223 = pneg %p89
        $region38: #{tpu_custom_call.1} parent=31 // pred_check_branch
          %225 = sbr.rel (%p223) target = $region40
        $region39: #{tpu_custom_call.1} parent=31 // pred_region
          %226 = dma.done [#allocation8], 3328
        $region40: #{tpu_custom_call.1} parent=31 // pred_fallthru
          _
        %s227 = sand.u32 %s50, 1
        %s228 = scalar_lea.sflag [#allocation5], %s227
        %s229 = sand.u32 %s50, 1
        %s230 = smul.addr %s229, 64
        %s231 = scalar_lea.vmem [#allocation4], %s230
        %p232 = pneg %p63
        %p233 = pneg %p60
        %p234 = pneg %p89
        %p235 = pneg %p86
        %p236 = scmp.lt.s32.totalorder %s27, 0
        %s237 = scalar_select %p236, %s27, 0
        %s238 = scalar_lea.vmem %s2, %s237
        %p239 = pneg %p115
        %p240 = pneg %p112
        %p241 = pneg %p145
        %p242 = pneg %p142
        %s243 = sand.u32 %s132, 1
        %s244 = scalar_lea.sflag [#allocation6], %s243
        %s245 = sand.u32 %s132, 1
        %s246 = smul.addr %s245, 64
        %s247 = scalar_lea.vmem [#allocation9], %s246
        %p248 = scmp.lt.s32.totalorder %s27, 0
        %s249 = scalar_select %p248, %s27, 0
        %s250 = scalar_lea.vmem %s2, %s249
        %s251 = smul.u32 8, %s28
        %p252 = scmp.eq.s32.totalorder %s28, 0
        // Predicated region
        $region41: #{tpu_custom_call.1} parent=31 // pred_check
          %p253 = pneg %p252
        $region42: #{tpu_custom_call.1} parent=31 // pred_check_branch
          %255 = sbr.rel (%p253) target = $region44
        $region43: #{tpu_custom_call.1} parent=31 // pred_region
          %256 = vst [vmem:[#allocation2] sm:$0xff] 0.0
          %257 = vst [vmem:[#allocation2 + $0x8] sm:$0xff] 0.0
          %258 = vst [vmem:[#allocation2 + $0x10] sm:$0xf] 0.0
          %259 = vst [vmem:[#allocation2 + $0x18] sm:$0xff] 0.0
          %260 = vst [vmem:[#allocation2 + $0x20] sm:$0xff] 0.0
          %261 = vst [vmem:[#allocation2 + $0x28] sm:$0xf] 0.0
          %262 = vst [vmem:[#allocation2 + $0x30] sm:$0xff] 0.0
          %263 = vst [vmem:[#allocation2 + $0x38] sm:$0xff] 0.0
          %264 = vst [vmem:[#allocation2 + $0x40] sm:$0xf] 0.0
          %265 = vst [vmem:[#allocation2 + $0x48] sm:$0xff] 0.0
          %266 = vst [vmem:[#allocation2 + $0x50] sm:$0xff] 0.0
          %267 = vst [vmem:[#allocation2 + $0x58] sm:$0xf] 0.0
          %268 = vst [vmem:[#allocation2 + $0x60] sm:$0xff] 0.0
          %269 = vst [vmem:[#allocation2 + $0x68] sm:$0xff] 0.0
          %270 = vst [vmem:[#allocation2 + $0x70] sm:$0xf] 0.0
          %271 = vst [vmem:[#allocation2 + $0x78] sm:$0xff] 0.0
          %272 = vst [vmem:[#allocation2 + $0x80] sm:$0xff] 0.0
          %273 = vst [vmem:[#allocation2 + $0x88] sm:$0xf] 0.0
          %s274 = scalar_lea.vmem [#allocation2], 336
          %275 = vst [vmem:[%s274] sm:$0xff] 0.0
          %276 = vst [vmem:[%s274 + $0x8] sm:$0xff] 0.0
          %277 = vst [vmem:[%s274 + $0x10] sm:$0xf] 0.0
          %278 = vst [vmem:[%s274 + $0x18] sm:$0xff] 0.0
          %279 = vst [vmem:[%s274 + $0x20] sm:$0xff] 0.0
          %280 = vst [vmem:[%s274 + $0x28] sm:$0xf] 0.0
          %281 = vst [vmem:[%s274 + $0x30] sm:$0xff] 0.0
          %282 = vst [vmem:[%s274 + $0x38] sm:$0xff] 0.0
          %283 = vst [vmem:[%s274 + $0x40] sm:$0xf] 0.0
          %284 = vst [vmem:[%s274 + $0x48] sm:$0xff] 0.0
          %285 = vst [vmem:[%s274 + $0x50] sm:$0xff] 0.0
          %286 = vst [vmem:[%s274 + $0x58] sm:$0xf] 0.0
          %287 = vst [vmem:[%s274 + $0x60] sm:$0xff] 0.0
          %288 = vst [vmem:[%s274 + $0x68] sm:$0xff] 0.0
          %289 = vst [vmem:[%s274 + $0x70] sm:$0xf] 0.0
          %290 = vst [vmem:[%s274 + $0x78] sm:$0xff] 0.0
          %291 = vst [vmem:[%s274 + $0x80] sm:$0xff] 0.0
          %292 = vst [vmem:[%s274 + $0x88] sm:$0xf] 0.0
          %s293 = scalar_lea.vmem [#allocation2], 144
          %294 = vst [vmem:[%s293] sm:$0x3f] 0.0
          %295 = vst [vmem:[%s293 + $0x18] sm:$0x3f] 0.0
          %296 = vst [vmem:[%s293 + $0x30] sm:$0x3f] 0.0
          %297 = vst [vmem:[%s293 + $0x48] sm:$0x3f] 0.0
          %298 = vst [vmem:[%s293 + $0x60] sm:$0x3f] 0.0
          %299 = vst [vmem:[%s293 + $0x78] sm:$0x3f] 0.0
          %300 = vst [vmem:[%s293 + $0x90] sm:$0x3f] 0.0
          %301 = vst [vmem:[%s293 + $0xa8] sm:$0x3f] 0.0
          %302 = vst [vmem:[%s293 + $0xe] sm:$0x3f] 0.0
          %303 = vst [vmem:[%s293 + $0x26] sm:$0x3f] 0.0
          %304 = vst [vmem:[%s293 + $0x3e] sm:$0x3f] 0.0
          %305 = vst [vmem:[%s293 + $0x56] sm:$0x3f] 0.0
          %306 = vst [vmem:[%s293 + $0x6e] sm:$0x3f] 0.0
          %307 = vst [vmem:[%s293 + $0x86] sm:$0x3f] 0.0
          %308 = vst [vmem:[%s293 + $0x9e] sm:$0x3f] 0.0
          %309 = vst [vmem:[%s293 + $0xb6] sm:$0x3f] 0.0
          %v310 = vld [vmem:[%s218] sm:$0xff]
          %v311 = vld [vmem:[%s218 + $0x8] sm:$0xff]
          %v312 = vld [vmem:[%s218 + $0x10] sm:$0xff]
          %v313 = vld [vmem:[%s218 + $0x18] sm:$0xff]
          %v314 = vld [vmem:[%s218 + $0x20] sm:$0xff]
          %v315 = vld [vmem:[%s218 + $0x28] sm:$0xff]
          %v316 = vld [vmem:[%s218 + $0x30] sm:$0xff]
          %v317 = vld [vmem:[%s218 + $0x38] sm:$0xff]
          %318 = vst [vmem:[%s293 + $0x6] sm:$0xff] %v310
          %319 = vst [vmem:[%s293 + $0x1e] sm:$0xff] %v311
          %320 = vst [vmem:[%s293 + $0x36] sm:$0xff] %v312
          %321 = vst [vmem:[%s293 + $0x4e] sm:$0xff] %v313
          %322 = vst [vmem:[%s293 + $0x66] sm:$0xff] %v314
          %323 = vst [vmem:[%s293 + $0x7e] sm:$0xff] %v315
          %324 = vst [vmem:[%s293 + $0x96] sm:$0xff] %v316
          %325 = vst [vmem:[%s293 + $0xae] sm:$0xff] %v317
          %v326 = vld [vmem:[#allocation2] sm:$0xff]
          %v327 = vld [vmem:[#allocation2 + $0x18] sm:$0xff]
          %v328 = vld [vmem:[#allocation2 + $0x30] sm:$0xff]
          %v329 = vld [vmem:[#allocation2 + $0x48] sm:$0xff]
          %v330 = vld [vmem:[#allocation2 + $0x60] sm:$0xff]
          %v331 = vld [vmem:[#allocation2 + $0x78] sm:$0xff]
          %v332 = vld [vmem:[#allocation2 + $0x90] sm:$0xff]
          %v333 = vld [vmem:[#allocation2 + $0xa8] sm:$0xff]
          %334 = vst [vmem:[#allocation3] sm:$0xff] %v326
          %335 = vst [vmem:[#allocation3 + $0x8] sm:$0xff] %v327
          %336 = vst [vmem:[#allocation3 + $0x10] sm:$0xff] %v328
          %337 = vst [vmem:[#allocation3 + $0x18] sm:$0xff] %v329
          %338 = vst [vmem:[#allocation3 + $0x20] sm:$0xff] %v330
          %339 = vst [vmem:[#allocation3 + $0x28] sm:$0xff] %v331
          %340 = vst [vmem:[#allocation3 + $0x30] sm:$0xff] %v332
          %341 = vst [vmem:[#allocation3 + $0x38] sm:$0xff] %v333
          %s342 = scalar_lea.vmem [#allocation2], 192
          %v343 = vld [vmem:[%s342] sm:$0xff]
          %v344 = vld [vmem:[%s342 + $0x18] sm:$0xff]
          %v345 = vld [vmem:[%s342 + $0x30] sm:$0xff]
          %v346 = vld [vmem:[%s342 + $0x48] sm:$0xff]
          %v347 = vld [vmem:[%s342 + $0x60] sm:$0xff]
          %v348 = vld [vmem:[%s342 + $0x78] sm:$0xff]
          %v349 = vld [vmem:[%s342 + $0x90] sm:$0xff]
          %v350 = vld [vmem:[%s342 + $0xa8] sm:$0xff]
          %s351 = scalar_lea.vmem [#allocation3], 64
          %352 = vst [vmem:[%s351] sm:$0xff] %v343
          %353 = vst [vmem:[%s351 + $0x8] sm:$0xff] %v344
          %354 = vst [vmem:[%s351 + $0x10] sm:$0xff] %v345
          %355 = vst [vmem:[%s351 + $0x18] sm:$0xff] %v346
          %356 = vst [vmem:[%s351 + $0x20] sm:$0xff] %v347
          %357 = vst [vmem:[%s351 + $0x28] sm:$0xff] %v348
          %358 = vst [vmem:[%s351 + $0x30] sm:$0xff] %v349
          %359 = vst [vmem:[%s351 + $0x38] sm:$0xff] %v350
          %s360 = scalar_lea.vmem [#allocation2], 384
          %v361 = vld [vmem:[%s360] sm:$0xff]
          %v362 = vld [vmem:[%s360 + $0x18] sm:$0xff]
          %v363 = vld [vmem:[%s360 + $0x30] sm:$0xff]
          %v364 = vld [vmem:[%s360 + $0x48] sm:$0xff]
          %s365 = scalar_lea.vmem [#allocation3], 128
          %366 = vst [vmem:[%s365] sm:$0xff] %v361
          %367 = vst [vmem:[%s365 + $0x8] sm:$0xff] %v362
          %368 = vst [vmem:[%s365 + $0x10] sm:$0xff] %v363
          %369 = vst [vmem:[%s365 + $0x18] sm:$0xff] %v364
          %v370 = vld [vmem:[#allocation2 + $0x1] sm:$0xff]
          %v371 = vld [vmem:[#allocation2 + $0x19] sm:$0xff]
          %v372 = vld [vmem:[#allocation2 + $0x31] sm:$0xff]
          %v373 = vld [vmem:[#allocation2 + $0x49] sm:$0xff]
          %v374 = vld [vmem:[#allocation2 + $0x61] sm:$0xff]
          %v375 = vld [vmem:[#allocation2 + $0x79] sm:$0xff]
          %v376 = vld [vmem:[#allocation2 + $0x91] sm:$0xff]
          %v377 = vld [vmem:[#allocation2 + $0xa9] sm:$0xff]
          %s378 = scalar_lea.vmem [#allocation3], 160
          %379 = vst [vmem:[%s378] sm:$0xff] %v370
          %380 = vst [vmem:[%s378 + $0x8] sm:$0xff] %v371
          %381 = vst [vmem:[%s378 + $0x10] sm:$0xff] %v372
          %382 = vst [vmem:[%s378 + $0x18] sm:$0xff] %v373
          %383 = vst [vmem:[%s378 + $0x20] sm:$0xff] %v374
          %384 = vst [vmem:[%s378 + $0x28] sm:$0xff] %v375
          %385 = vst [vmem:[%s378 + $0x30] sm:$0xff] %v376
          %386 = vst [vmem:[%s378 + $0x38] sm:$0xff] %v377
          %v387 = vld [vmem:[%s342 + $0x1] sm:$0xff]
          %v388 = vld [vmem:[%s342 + $0x19] sm:$0xff]
          %v389 = vld [vmem:[%s342 + $0x31] sm:$0xff]
          %v390 = vld [vmem:[%s342 + $0x49] sm:$0xff]
          %v391 = vld [vmem:[%s342 + $0x61] sm:$0xff]
          %v392 = vld [vmem:[%s342 + $0x79] sm:$0xff]
          %v393 = vld [vmem:[%s342 + $0x91] sm:$0xff]
          %v394 = vld [vmem:[%s342 + $0xa9] sm:$0xff]
          %s395 = scalar_lea.vmem [#allocation3], 224
          %396 = vst [vmem:[%s395] sm:$0xff] %v387
          %397 = vst [vmem:[%s395 + $0x8] sm:$0xff] %v388
          %398 = vst [vmem:[%s395 + $0x10] sm:$0xff] %v389
          %399 = vst [vmem:[%s395 + $0x18] sm:$0xff] %v390
          %400 = vst [vmem:[%s395 + $0x20] sm:$0xff] %v391
          %401 = vst [vmem:[%s395 + $0x28] sm:$0xff] %v392
          %402 = vst [vmem:[%s395 + $0x30] sm:$0xff] %v393
          %403 = vst [vmem:[%s395 + $0x38] sm:$0xff] %v394
          %v404 = vld [vmem:[%s360 + $0x1] sm:$0xff]
          %v405 = vld [vmem:[%s360 + $0x19] sm:$0xff]
          %v406 = vld [vmem:[%s360 + $0x31] sm:$0xff]
          %v407 = vld [vmem:[%s360 + $0x49] sm:$0xff]
          %s408 = scalar_lea.vmem [#allocation3], 288
          %409 = vst [vmem:[%s408] sm:$0xff] %v404
          %410 = vst [vmem:[%s408 + $0x8] sm:$0xff] %v405
          %411 = vst [vmem:[%s408 + $0x10] sm:$0xff] %v406
          %412 = vst [vmem:[%s408 + $0x18] sm:$0xff] %v407
          %v413 = vld [vmem:[#allocation2 + $0x2] sm:$0xff]
          %v414 = vld [vmem:[#allocation2 + $0x1a] sm:$0xff]
          %v415 = vld [vmem:[#allocation2 + $0x32] sm:$0xff]
          %v416 = vld [vmem:[#allocation2 + $0x4a] sm:$0xff]
          %v417 = vld [vmem:[#allocation2 + $0x62] sm:$0xff]
          %v418 = vld [vmem:[#allocation2 + $0x7a] sm:$0xff]
          %v419 = vld [vmem:[#allocation2 + $0x92] sm:$0xff]
          %v420 = vld [vmem:[#allocation2 + $0xaa] sm:$0xff]
          %s421 = scalar_lea.vmem [#allocation3], 320
          %422 = vst [vmem:[%s421] sm:$0xff] %v413
          %423 = vst [vmem:[%s421 + $0x8] sm:$0xff] %v414
          %424 = vst [vmem:[%s421 + $0x10] sm:$0xff] %v415
          %425 = vst [vmem:[%s421 + $0x18] sm:$0xff] %v416
          %426 = vst [vmem:[%s421 + $0x20] sm:$0xff] %v417
          %427 = vst [vmem:[%s421 + $0x28] sm:$0xff] %v418
          %428 = vst [vmem:[%s421 + $0x30] sm:$0xff] %v419
          %429 = vst [vmem:[%s421 + $0x38] sm:$0xff] %v420
          %v430 = vld [vmem:[%s342 + $0x2] sm:$0xff]
          %v431 = vld [vmem:[%s342 + $0x1a] sm:$0xff]
          %v432 = vld [vmem:[%s342 + $0x32] sm:$0xff]
          %v433 = vld [vmem:[%s342 + $0x4a] sm:$0xff]
          %v434 = vld [vmem:[%s342 + $0x62] sm:$0xff]
          %v435 = vld [vmem:[%s342 + $0x7a] sm:$0xff]
          %v436 = vld [vmem:[%s342 + $0x92] sm:$0xff]
          %v437 = vld [vmem:[%s342 + $0xaa] sm:$0xff]
          %s438 = scalar_lea.vmem [#allocation3], 384
          %439 = vst [vmem:[%s438] sm:$0xff] %v430
          %440 = vst [vmem:[%s438 + $0x8] sm:$0xff] %v431
          %441 = vst [vmem:[%s438 + $0x10] sm:$0xff] %v432
          %442 = vst [vmem:[%s438 + $0x18] sm:$0xff] %v433
          %443 = vst [vmem:[%s438 + $0x20] sm:$0xff] %v434
          %444 = vst [vmem:[%s438 + $0x28] sm:$0xff] %v435
          %445 = vst [vmem:[%s438 + $0x30] sm:$0xff] %v436
          %446 = vst [vmem:[%s438 + $0x38] sm:$0xff] %v437
          %v447 = vld [vmem:[%s360 + $0x2] sm:$0xff]
          %v448 = vld [vmem:[%s360 + $0x1a] sm:$0xff]
          %v449 = vld [vmem:[%s360 + $0x32] sm:$0xff]
          %v450 = vld [vmem:[%s360 + $0x4a] sm:$0xff]
          %s451 = scalar_lea.vmem [#allocation3], 448
          %452 = vst [vmem:[%s451] sm:$0xff] %v447
          %453 = vst [vmem:[%s451 + $0x8] sm:$0xff] %v448
          %454 = vst [vmem:[%s451 + $0x10] sm:$0xff] %v449
          %455 = vst [vmem:[%s451 + $0x18] sm:$0xff] %v450
          %v456 = vld [vmem:[#allocation2 + $0x3] sm:$0xff]
          %v457 = vld [vmem:[#allocation2 + $0x1b] sm:$0xff]
          %v458 = vld [vmem:[#allocation2 + $0x33] sm:$0xff]
          %v459 = vld [vmem:[#allocation2 + $0x4b] sm:$0xff]
          %v460 = vld [vmem:[#allocation2 + $0x63] sm:$0xff]
          %v461 = vld [vmem:[#allocation2 + $0x7b] sm:$0xff]
          %v462 = vld [vmem:[#allocation2 + $0x93] sm:$0xff]
          %v463 = vld [vmem:[#allocation2 + $0xab] sm:$0xff]
          %s464 = scalar_lea.vmem [#allocation3], 480
          %465 = vst [vmem:[%s464] sm:$0xff] %v456
          %466 = vst [vmem:[%s464 + $0x8] sm:$0xff] %v457
          %467 = vst [vmem:[%s464 + $0x10] sm:$0xff] %v458
          %468 = vst [vmem:[%s464 + $0x18] sm:$0xff] %v459
          %469 = vst [vmem:[%s464 + $0x20] sm:$0xff] %v460
          %470 = vst [vmem:[%s464 + $0x28] sm:$0xff] %v461
          %471 = vst [vmem:[%s464 + $0x30] sm:$0xff] %v462
          %472 = vst [vmem:[%s464 + $0x38] sm:$0xff] %v463
          %v473 = vld [vmem:[%s342 + $0x3] sm:$0xff]
          %v474 = vld [vmem:[%s342 + $0x1b] sm:$0xff]
          %v475 = vld [vmem:[%s342 + $0x33] sm:$0xff]
          %v476 = vld [vmem:[%s342 + $0x4b] sm:$0xff]
          %v477 = vld [vmem:[%s342 + $0x63] sm:$0xff]
          %v478 = vld [vmem:[%s342 + $0x7b] sm:$0xff]
          %v479 = vld [vmem:[%s342 + $0x93] sm:$0xff]
          %v480 = vld [vmem:[%s342 + $0xab] sm:$0xff]
          %s481 = scalar_lea.vmem [#allocation3], 544
          %482 = vst [vmem:[%s481] sm:$0xff] %v473
          %483 = vst [vmem:[%s481 + $0x8] sm:$0xff] %v474
          %484 = vst [vmem:[%s481 + $0x10] sm:$0xff] %v475
          %485 = vst [vmem:[%s481 + $0x18] sm:$0xff] %v476
          %486 = vst [vmem:[%s481 + $0x20] sm:$0xff] %v477
          %487 = vst [vmem:[%s481 + $0x28] sm:$0xff] %v478
          %488 = vst [vmem:[%s481 + $0x30] sm:$0xff] %v479
          %489 = vst [vmem:[%s481 + $0x38] sm:$0xff] %v480
          %v490 = vld [vmem:[%s360 + $0x3] sm:$0xff]
          %v491 = vld [vmem:[%s360 + $0x1b] sm:$0xff]
          %v492 = vld [vmem:[%s360 + $0x33] sm:$0xff]
          %v493 = vld [vmem:[%s360 + $0x4b] sm:$0xff]
          %s494 = scalar_lea.vmem [#allocation3], 608
          %495 = vst [vmem:[%s494] sm:$0xff] %v490
          %496 = vst [vmem:[%s494 + $0x8] sm:$0xff] %v491
          %497 = vst [vmem:[%s494 + $0x10] sm:$0xff] %v492
          %498 = vst [vmem:[%s494 + $0x18] sm:$0xff] %v493
          %v499 = vld [vmem:[#allocation2 + $0x4] sm:$0xff]
          %v500 = vld [vmem:[#allocation2 + $0x1c] sm:$0xff]
          %v501 = vld [vmem:[#allocation2 + $0x34] sm:$0xff]
          %v502 = vld [vmem:[#allocation2 + $0x4c] sm:$0xff]
          %v503 = vld [vmem:[#allocation2 + $0x64] sm:$0xff]
          %v504 = vld [vmem:[#allocation2 + $0x7c] sm:$0xff]
          %v505 = vld [vmem:[#allocation2 + $0x94] sm:$0xff]
          %v506 = vld [vmem:[#allocation2 + $0xac] sm:$0xff]
          %s507 = scalar_lea.vmem [#allocation3], 640
          %508 = vst [vmem:[%s507] sm:$0xff] %v499
          %509 = vst [vmem:[%s507 + $0x8] sm:$0xff] %v500
          %510 = vst [vmem:[%s507 + $0x10] sm:$0xff] %v501
          %511 = vst [vmem:[%s507 + $0x18] sm:$0xff] %v502
          %512 = vst [vmem:[%s507 + $0x20] sm:$0xff] %v503
          %513 = vst [vmem:[%s507 + $0x28] sm:$0xff] %v504
          %514 = vst [vmem:[%s507 + $0x30] sm:$0xff] %v505
          %515 = vst [vmem:[%s507 + $0x38] sm:$0xff] %v506
          %v516 = vld [vmem:[%s342 + $0x4] sm:$0xff]
          %v517 = vld [vmem:[%s342 + $0x1c] sm:$0xff]
          %v518 = vld [vmem:[%s342 + $0x34] sm:$0xff]
          %v519 = vld [vmem:[%s342 + $0x4c] sm:$0xff]
          %v520 = vld [vmem:[%s342 + $0x64] sm:$0xff]
          %v521 = vld [vmem:[%s342 + $0x7c] sm:$0xff]
          %v522 = vld [vmem:[%s342 + $0x94] sm:$0xff]
          %v523 = vld [vmem:[%s342 + $0xac] sm:$0xff]
          %s524 = scalar_lea.vmem [#allocation3], 704
          %525 = vst [vmem:[%s524] sm:$0xff] %v516
          %526 = vst [vmem:[%s524 + $0x8] sm:$0xff] %v517
          %527 = vst [vmem:[%s524 + $0x10] sm:$0xff] %v518
          %528 = vst [vmem:[%s524 + $0x18] sm:$0xff] %v519
          %529 = vst [vmem:[%s524 + $0x20] sm:$0xff] %v520
          %530 = vst [vmem:[%s524 + $0x28] sm:$0xff] %v521
          %531 = vst [vmem:[%s524 + $0x30] sm:$0xff] %v522
          %532 = vst [vmem:[%s524 + $0x38] sm:$0xff] %v523
          %v533 = vld [vmem:[%s360 + $0x4] sm:$0xff]
          %v534 = vld [vmem:[%s360 + $0x1c] sm:$0xff]
          %v535 = vld [vmem:[%s360 + $0x34] sm:$0xff]
          %v536 = vld [vmem:[%s360 + $0x4c] sm:$0xff]
          %s537 = scalar_lea.vmem [#allocation3], 768
          %538 = vst [vmem:[%s537] sm:$0xff] %v533
          %539 = vst [vmem:[%s537 + $0x8] sm:$0xff] %v534
          %540 = vst [vmem:[%s537 + $0x10] sm:$0xff] %v535
          %541 = vst [vmem:[%s537 + $0x18] sm:$0xff] %v536
          %v542 = vld [vmem:[#allocation2 + $0x5] sm:$0xff]
          %v543 = vld [vmem:[#allocation2 + $0x1d] sm:$0xff]
          %v544 = vld [vmem:[#allocation2 + $0x35] sm:$0xff]
          %v545 = vld [vmem:[#allocation2 + $0x4d] sm:$0xff]
          %v546 = vld [vmem:[#allocation2 + $0x65] sm:$0xff]
          %v547 = vld [vmem:[#allocation2 + $0x7d] sm:$0xff]
          %v548 = vld [vmem:[#allocation2 + $0x95] sm:$0xff]
          %v549 = vld [vmem:[#allocation2 + $0xad] sm:$0xff]
          %s550 = scalar_lea.vmem [#allocation3], 800
          %551 = vst [vmem:[%s550] sm:$0xff] %v542
          %552 = vst [vmem:[%s550 + $0x8] sm:$0xff] %v543
          %553 = vst [vmem:[%s550 + $0x10] sm:$0xff] %v544
          %554 = vst [vmem:[%s550 + $0x18] sm:$0xff] %v545
          %555 = vst [vmem:[%s550 + $0x20] sm:$0xff] %v546
          %556 = vst [vmem:[%s550 + $0x28] sm:$0xff] %v547
          %557 = vst [vmem:[%s550 + $0x30] sm:$0xff] %v548
          %558 = vst [vmem:[%s550 + $0x38] sm:$0xff] %v549
          %v559 = vld [vmem:[%s342 + $0x5] sm:$0xff]
          %v560 = vld [vmem:[%s342 + $0x1d] sm:$0xff]
          %v561 = vld [vmem:[%s342 + $0x35] sm:$0xff]
          %v562 = vld [vmem:[%s342 + $0x4d] sm:$0xff]
          %v563 = vld [vmem:[%s342 + $0x65] sm:$0xff]
          %v564 = vld [vmem:[%s342 + $0x7d] sm:$0xff]
          %v565 = vld [vmem:[%s342 + $0x95] sm:$0xff]
          %v566 = vld [vmem:[%s342 + $0xad] sm:$0xff]
          %s567 = scalar_lea.vmem [#allocation3], 864
          %568 = vst [vmem:[%s567] sm:$0xff] %v559
          %569 = vst [vmem:[%s567 + $0x8] sm:$0xff] %v560
          %570 = vst [vmem:[%s567 + $0x10] sm:$0xff] %v561
          %571 = vst [vmem:[%s567 + $0x18] sm:$0xff] %v562
          %572 = vst [vmem:[%s567 + $0x20] sm:$0xff] %v563
          %573 = vst [vmem:[%s567 + $0x28] sm:$0xff] %v564
          %574 = vst [vmem:[%s567 + $0x30] sm:$0xff] %v565
          %575 = vst [vmem:[%s567 + $0x38] sm:$0xff] %v566
          %v576 = vld [vmem:[%s360 + $0x5] sm:$0xff]
          %v577 = vld [vmem:[%s360 + $0x1d] sm:$0xff]
          %v578 = vld [vmem:[%s360 + $0x35] sm:$0xff]
          %v579 = vld [vmem:[%s360 + $0x4d] sm:$0xff]
          %s580 = scalar_lea.vmem [#allocation3], 928
          %581 = vst [vmem:[%s580] sm:$0xff] %v576
          %582 = vst [vmem:[%s580 + $0x8] sm:$0xff] %v577
          %583 = vst [vmem:[%s580 + $0x10] sm:$0xff] %v578
          %584 = vst [vmem:[%s580 + $0x18] sm:$0xff] %v579
          %v585 = vld [vmem:[#allocation2 + $0x6] sm:$0xff]
          %v586 = vld [vmem:[#allocation2 + $0x1e] sm:$0xff]
          %v587 = vld [vmem:[#allocation2 + $0x36] sm:$0xff]
          %v588 = vld [vmem:[#allocation2 + $0x4e] sm:$0xff]
          %v589 = vld [vmem:[#allocation2 + $0x66] sm:$0xff]
          %v590 = vld [vmem:[#allocation2 + $0x7e] sm:$0xff]
          %v591 = vld [vmem:[#allocation2 + $0x96] sm:$0xff]
          %v592 = vld [vmem:[#allocation2 + $0xae] sm:$0xff]
          %s593 = scalar_lea.vmem [#allocation3], 960
          %594 = vst [vmem:[%s593] sm:$0xff] %v585
          %595 = vst [vmem:[%s593 + $0x8] sm:$0xff] %v586
          %596 = vst [vmem:[%s593 + $0x10] sm:$0xff] %v587
          %597 = vst [vmem:[%s593 + $0x18] sm:$0xff] %v588
          %598 = vst [vmem:[%s593 + $0x20] sm:$0xff] %v589
          %599 = vst [vmem:[%s593 + $0x28] sm:$0xff] %v590
          %600 = vst [vmem:[%s593 + $0x30] sm:$0xff] %v591
          %601 = vst [vmem:[%s593 + $0x38] sm:$0xff] %v592
          %v602 = vld [vmem:[%s342 + $0x6] sm:$0xff]
          %v603 = vld [vmem:[%s342 + $0x1e] sm:$0xff]
          %v604 = vld [vmem:[%s342 + $0x36] sm:$0xff]
          %v605 = vld [vmem:[%s342 + $0x4e] sm:$0xff]
          %v606 = vld [vmem:[%s342 + $0x66] sm:$0xff]
          %v607 = vld [vmem:[%s342 + $0x7e] sm:$0xff]
          %v608 = vld [vmem:[%s342 + $0x96] sm:$0xff]
          %v609 = vld [vmem:[%s342 + $0xae] sm:$0xff]
          %s610 = scalar_lea.vmem [#allocation3], 1024
          %611 = vst [vmem:[%s610] sm:$0xff] %v602
          %612 = vst [vmem:[%s610 + $0x8] sm:$0xff] %v603
          %613 = vst [vmem:[%s610 + $0x10] sm:$0xff] %v604
          %614 = vst [vmem:[%s610 + $0x18] sm:$0xff] %v605
          %615 = vst [vmem:[%s610 + $0x20] sm:$0xff] %v606
          %616 = vst [vmem:[%s610 + $0x28] sm:$0xff] %v607
          %617 = vst [vmem:[%s610 + $0x30] sm:$0xff] %v608
          %618 = vst [vmem:[%s610 + $0x38] sm:$0xff] %v609
          %v619 = vld [vmem:[%s360 + $0x6] sm:$0xff]
          %v620 = vld [vmem:[%s360 + $0x1e] sm:$0xff]
          %v621 = vld [vmem:[%s360 + $0x36] sm:$0xff]
          %v622 = vld [vmem:[%s360 + $0x4e] sm:$0xff]
          %s623 = scalar_lea.vmem [#allocation3], 1088
          %624 = vst [vmem:[%s623] sm:$0xff] %v619
          %625 = vst [vmem:[%s623 + $0x8] sm:$0xff] %v620
          %626 = vst [vmem:[%s623 + $0x10] sm:$0xff] %v621
          %627 = vst [vmem:[%s623 + $0x18] sm:$0xff] %v622
          %v628 = vld [vmem:[#allocation2 + $0x7] sm:$0xff]
          %v629 = vld [vmem:[#allocation2 + $0x1f] sm:$0xff]
          %v630 = vld [vmem:[#allocation2 + $0x37] sm:$0xff]
          %v631 = vld [vmem:[#allocation2 + $0x4f] sm:$0xff]
          %v632 = vld [vmem:[#allocation2 + $0x67] sm:$0xff]
          %v633 = vld [vmem:[#allocation2 + $0x7f] sm:$0xff]
          %v634 = vld [vmem:[#allocation2 + $0x97] sm:$0xff]
          %v635 = vld [vmem:[#allocation2 + $0xaf] sm:$0xff]
          %s636 = scalar_lea.vmem [#allocation3], 1120
          %637 = vst [vmem:[%s636] sm:$0xff] %v628
          %638 = vst [vmem:[%s636 + $0x8] sm:$0xff] %v629
          %639 = vst [vmem:[%s636 + $0x10] sm:$0xff] %v630
          %640 = vst [vmem:[%s636 + $0x18] sm:$0xff] %v631
          %641 = vst [vmem:[%s636 + $0x20] sm:$0xff] %v632
          %642 = vst [vmem:[%s636 + $0x28] sm:$0xff] %v633
          %643 = vst [vmem:[%s636 + $0x30] sm:$0xff] %v634
          %644 = vst [vmem:[%s636 + $0x38] sm:$0xff] %v635
          %v645 = vld [vmem:[%s342 + $0x7] sm:$0xff]
          %v646 = vld [vmem:[%s342 + $0x1f] sm:$0xff]
          %v647 = vld [vmem:[%s342 + $0x37] sm:$0xff]
          %v648 = vld [vmem:[%s342 + $0x4f] sm:$0xff]
          %v649 = vld [vmem:[%s342 + $0x67] sm:$0xff]
          %v650 = vld [vmem:[%s342 + $0x7f] sm:$0xff]
          %v651 = vld [vmem:[%s342 + $0x97] sm:$0xff]
          %v652 = vld [vmem:[%s342 + $0xaf] sm:$0xff]
          %s653 = scalar_lea.vmem [#allocation3], 1184
          %654 = vst [vmem:[%s653] sm:$0xff] %v645
          %655 = vst [vmem:[%s653 + $0x8] sm:$0xff] %v646
          %656 = vst [vmem:[%s653 + $0x10] sm:$0xff] %v647
          %657 = vst [vmem:[%s653 + $0x18] sm:$0xff] %v648
          %658 = vst [vmem:[%s653 + $0x20] sm:$0xff] %v649
          %659 = vst [vmem:[%s653 + $0x28] sm:$0xff] %v650
          %660 = vst [vmem:[%s653 + $0x30] sm:$0xff] %v651
          %661 = vst [vmem:[%s653 + $0x38] sm:$0xff] %v652
          %v662 = vld [vmem:[%s360 + $0x7] sm:$0xff]
          %v663 = vld [vmem:[%s360 + $0x1f] sm:$0xff]
          %v664 = vld [vmem:[%s360 + $0x37] sm:$0xff]
          %v665 = vld [vmem:[%s360 + $0x4f] sm:$0xff]
          %s666 = scalar_lea.vmem [#allocation3], 1248
          %667 = vst [vmem:[%s666] sm:$0xff] %v662
          %668 = vst [vmem:[%s666 + $0x8] sm:$0xff] %v663
          %669 = vst [vmem:[%s666 + $0x10] sm:$0xff] %v664
          %670 = vst [vmem:[%s666 + $0x18] sm:$0xff] %v665
          %v671 = vld [vmem:[#allocation2 + $0x8] sm:$0xff]
          %v672 = vld [vmem:[#allocation2 + $0x20] sm:$0xff]
          %v673 = vld [vmem:[#allocation2 + $0x38] sm:$0xff]
          %v674 = vld [vmem:[#allocation2 + $0x50] sm:$0xff]
          %v675 = vld [vmem:[#allocation2 + $0x68] sm:$0xff]
          %v676 = vld [vmem:[#allocation2 + $0x80] sm:$0xff]
          %v677 = vld [vmem:[#allocation2 + $0x98] sm:$0xff]
          %v678 = vld [vmem:[#allocation2 + $0xb0] sm:$0xff]
          %s679 = scalar_lea.vmem [#allocation3], 1280
          %680 = vst [vmem:[%s679] sm:$0xff] %v671
          %681 = vst [vmem:[%s679 + $0x8] sm:$0xff] %v672
          %682 = vst [vmem:[%s679 + $0x10] sm:$0xff] %v673
          %683 = vst [vmem:[%s679 + $0x18] sm:$0xff] %v674
          %684 = vst [vmem:[%s679 + $0x20] sm:$0xff] %v675
          %685 = vst [vmem:[%s679 + $0x28] sm:$0xff] %v676
          %686 = vst [vmem:[%s679 + $0x30] sm:$0xff] %v677
          %687 = vst [vmem:[%s679 + $0x38] sm:$0xff] %v678
          %v688 = vld [vmem:[%s342 + $0x8] sm:$0xff]
          %v689 = vld [vmem:[%s342 + $0x20] sm:$0xff]
          %v690 = vld [vmem:[%s342 + $0x38] sm:$0xff]
          %v691 = vld [vmem:[%s342 + $0x50] sm:$0xff]
          %v692 = vld [vmem:[%s342 + $0x68] sm:$0xff]
          %v693 = vld [vmem:[%s342 + $0x80] sm:$0xff]
          %v694 = vld [vmem:[%s342 + $0x98] sm:$0xff]
          %v695 = vld [vmem:[%s342 + $0xb0] sm:$0xff]
          %s696 = scalar_lea.vmem [#allocation3], 1344
          %697 = vst [vmem:[%s696] sm:$0xff] %v688
          %698 = vst [vmem:[%s696 + $0x8] sm:$0xff] %v689
          %699 = vst [vmem:[%s696 + $0x10] sm:$0xff] %v690
          %700 = vst [vmem:[%s696 + $0x18] sm:$0xff] %v691
          %701 = vst [vmem:[%s696 + $0x20] sm:$0xff] %v692
          %702 = vst [vmem:[%s696 + $0x28] sm:$0xff] %v693
          %703 = vst [vmem:[%s696 + $0x30] sm:$0xff] %v694
          %704 = vst [vmem:[%s696 + $0x38] sm:$0xff] %v695
          %v705 = vld [vmem:[%s360 + $0x8] sm:$0xff]
          %v706 = vld [vmem:[%s360 + $0x20] sm:$0xff]
          %v707 = vld [vmem:[%s360 + $0x38] sm:$0xff]
          %v708 = vld [vmem:[%s360 + $0x50] sm:$0xff]
          %s709 = scalar_lea.vmem [#allocation3], 1408
          %710 = vst [vmem:[%s709] sm:$0xff] %v705
          %711 = vst [vmem:[%s709 + $0x8] sm:$0xff] %v706
          %712 = vst [vmem:[%s709 + $0x10] sm:$0xff] %v707
          %713 = vst [vmem:[%s709 + $0x18] sm:$0xff] %v708
          %v714 = vld [vmem:[#allocation2 + $0x9] sm:$0xff]
          %v715 = vld [vmem:[#allocation2 + $0x21] sm:$0xff]
          %v716 = vld [vmem:[#allocation2 + $0x39] sm:$0xff]
          %v717 = vld [vmem:[#allocation2 + $0x51] sm:$0xff]
          %v718 = vld [vmem:[#allocation2 + $0x69] sm:$0xff]
          %v719 = vld [vmem:[#allocation2 + $0x81] sm:$0xff]
          %v720 = vld [vmem:[#allocation2 + $0x99] sm:$0xff]
          %v721 = vld [vmem:[#allocation2 + $0xb1] sm:$0xff]
          %s722 = scalar_lea.vmem [#allocation3], 1440
          %723 = vst [vmem:[%s722] sm:$0xff] %v714
          %724 = vst [vmem:[%s722 + $0x8] sm:$0xff] %v715
          %725 = vst [vmem:[%s722 + $0x10] sm:$0xff] %v716
          %726 = vst [vmem:[%s722 + $0x18] sm:$0xff] %v717
          %727 = vst [vmem:[%s722 + $0x20] sm:$0xff] %v718
          %728 = vst [vmem:[%s722 + $0x28] sm:$0xff] %v719
          %729 = vst [vmem:[%s722 + $0x30] sm:$0xff] %v720
          %730 = vst [vmem:[%s722 + $0x38] sm:$0xff] %v721
          %v731 = vld [vmem:[%s342 + $0x9] sm:$0xff]
          %v732 = vld [vmem:[%s342 + $0x21] sm:$0xff]
          %v733 = vld [vmem:[%s342 + $0x39] sm:$0xff]
          %v734 = vld [vmem:[%s342 + $0x51] sm:$0xff]
          %v735 = vld [vmem:[%s342 + $0x69] sm:$0xff]
          %v736 = vld [vmem:[%s342 + $0x81] sm:$0xff]
          %v737 = vld [vmem:[%s342 + $0x99] sm:$0xff]
          %v738 = vld [vmem:[%s342 + $0xb1] sm:$0xff]
          %s739 = scalar_lea.vmem [#allocation3], 1504
          %740 = vst [vmem:[%s739] sm:$0xff] %v731
          %741 = vst [vmem:[%s739 + $0x8] sm:$0xff] %v732
          %742 = vst [vmem:[%s739 + $0x10] sm:$0xff] %v733
          %743 = vst [vmem:[%s739 + $0x18] sm:$0xff] %v734
          %744 = vst [vmem:[%s739 + $0x20] sm:$0xff] %v735
          %745 = vst [vmem:[%s739 + $0x28] sm:$0xff] %v736
          %746 = vst [vmem:[%s739 + $0x30] sm:$0xff] %v737
          %747 = vst [vmem:[%s739 + $0x38] sm:$0xff] %v738
          %v748 = vld [vmem:[%s360 + $0x9] sm:$0xff]
          %v749 = vld [vmem:[%s360 + $0x21] sm:$0xff]
          %v750 = vld [vmem:[%s360 + $0x39] sm:$0xff]
          %v751 = vld [vmem:[%s360 + $0x51] sm:$0xff]
          %s752 = scalar_lea.vmem [#allocation3], 1568
          %753 = vst [vmem:[%s752] sm:$0xff] %v748
          %754 = vst [vmem:[%s752 + $0x8] sm:$0xff] %v749
          %755 = vst [vmem:[%s752 + $0x10] sm:$0xff] %v750
          %756 = vst [vmem:[%s752 + $0x18] sm:$0xff] %v751
          %v757 = vld [vmem:[#allocation2 + $0xa] sm:$0xff]
          %v758 = vld [vmem:[#allocation2 + $0x22] sm:$0xff]
          %v759 = vld [vmem:[#allocation2 + $0x3a] sm:$0xff]
          %v760 = vld [vmem:[#allocation2 + $0x52] sm:$0xff]
          %v761 = vld [vmem:[#allocation2 + $0x6a] sm:$0xff]
          %v762 = vld [vmem:[#allocation2 + $0x82] sm:$0xff]
          %v763 = vld [vmem:[#allocation2 + $0x9a] sm:$0xff]
          %v764 = vld [vmem:[#allocation2 + $0xb2] sm:$0xff]
          %s765 = scalar_lea.vmem [#allocation3], 1600
          %766 = vst [vmem:[%s765] sm:$0xff] %v757
          %767 = vst [vmem:[%s765 + $0x8] sm:$0xff] %v758
          %768 = vst [vmem:[%s765 + $0x10] sm:$0xff] %v759
          %769 = vst [vmem:[%s765 + $0x18] sm:$0xff] %v760
          %770 = vst [vmem:[%s765 + $0x20] sm:$0xff] %v761
          %771 = vst [vmem:[%s765 + $0x28] sm:$0xff] %v762
          %772 = vst [vmem:[%s765 + $0x30] sm:$0xff] %v763
          %773 = vst [vmem:[%s765 + $0x38] sm:$0xff] %v764
          %v774 = vld [vmem:[%s342 + $0xa] sm:$0xff]
          %v775 = vld [vmem:[%s342 + $0x22] sm:$0xff]
          %v776 = vld [vmem:[%s342 + $0x3a] sm:$0xff]
          %v777 = vld [vmem:[%s342 + $0x52] sm:$0xff]
          %v778 = vld [vmem:[%s342 + $0x6a] sm:$0xff]
          %v779 = vld [vmem:[%s342 + $0x82] sm:$0xff]
          %v780 = vld [vmem:[%s342 + $0x9a] sm:$0xff]
          %v781 = vld [vmem:[%s342 + $0xb2] sm:$0xff]
          %s782 = scalar_lea.vmem [#allocation3], 1664
          %783 = vst [vmem:[%s782] sm:$0xff] %v774
          %784 = vst [vmem:[%s782 + $0x8] sm:$0xff] %v775
          %785 = vst [vmem:[%s782 + $0x10] sm:$0xff] %v776
          %786 = vst [vmem:[%s782 + $0x18] sm:$0xff] %v777
          %787 = vst [vmem:[%s782 + $0x20] sm:$0xff] %v778
          %788 = vst [vmem:[%s782 + $0x28] sm:$0xff] %v779
          %789 = vst [vmem:[%s782 + $0x30] sm:$0xff] %v780
          %790 = vst [vmem:[%s782 + $0x38] sm:$0xff] %v781
          %v791 = vld [vmem:[%s360 + $0xa] sm:$0xff]
          %v792 = vld [vmem:[%s360 + $0x22] sm:$0xff]
          %v793 = vld [vmem:[%s360 + $0x3a] sm:$0xff]
          %v794 = vld [vmem:[%s360 + $0x52] sm:$0xff]
          %s795 = scalar_lea.vmem [#allocation3], 1728
          %796 = vst [vmem:[%s795] sm:$0xff] %v791
          %797 = vst [vmem:[%s795 + $0x8] sm:$0xff] %v792
          %798 = vst [vmem:[%s795 + $0x10] sm:$0xff] %v793
          %799 = vst [vmem:[%s795 + $0x18] sm:$0xff] %v794
          %v800 = vld [vmem:[#allocation2 + $0xb] sm:$0xff]
          %v801 = vld [vmem:[#allocation2 + $0x23] sm:$0xff]
          %v802 = vld [vmem:[#allocation2 + $0x3b] sm:$0xff]
          %v803 = vld [vmem:[#allocation2 + $0x53] sm:$0xff]
          %v804 = vld [vmem:[#allocation2 + $0x6b] sm:$0xff]
          %v805 = vld [vmem:[#allocation2 + $0x83] sm:$0xff]
          %v806 = vld [vmem:[#allocation2 + $0x9b] sm:$0xff]
          %v807 = vld [vmem:[#allocation2 + $0xb3] sm:$0xff]
          %s808 = scalar_lea.vmem [#allocation3], 1760
          %809 = vst [vmem:[%s808] sm:$0xff] %v800
          %810 = vst [vmem:[%s808 + $0x8] sm:$0xff] %v801
          %811 = vst [vmem:[%s808 + $0x10] sm:$0xff] %v802
          %812 = vst [vmem:[%s808 + $0x18] sm:$0xff] %v803
          %813 = vst [vmem:[%s808 + $0x20] sm:$0xff] %v804
          %814 = vst [vmem:[%s808 + $0x28] sm:$0xff] %v805
          %815 = vst [vmem:[%s808 + $0x30] sm:$0xff] %v806
          %816 = vst [vmem:[%s808 + $0x38] sm:$0xff] %v807
          %v817 = vld [vmem:[%s342 + $0xb] sm:$0xff]
          %v818 = vld [vmem:[%s342 + $0x23] sm:$0xff]
          %v819 = vld [vmem:[%s342 + $0x3b] sm:$0xff]
          %v820 = vld [vmem:[%s342 + $0x53] sm:$0xff]
          %v821 = vld [vmem:[%s342 + $0x6b] sm:$0xff]
          %v822 = vld [vmem:[%s342 + $0x83] sm:$0xff]
          %v823 = vld [vmem:[%s342 + $0x9b] sm:$0xff]
          %v824 = vld [vmem:[%s342 + $0xb3] sm:$0xff]
          %s825 = scalar_lea.vmem [#allocation3], 1824
          %826 = vst [vmem:[%s825] sm:$0xff] %v817
          %827 = vst [vmem:[%s825 + $0x8] sm:$0xff] %v818
          %828 = vst [vmem:[%s825 + $0x10] sm:$0xff] %v819
          %829 = vst [vmem:[%s825 + $0x18] sm:$0xff] %v820
          %830 = vst [vmem:[%s825 + $0x20] sm:$0xff] %v821
          %831 = vst [vmem:[%s825 + $0x28] sm:$0xff] %v822
          %832 = vst [vmem:[%s825 + $0x30] sm:$0xff] %v823
          %833 = vst [vmem:[%s825 + $0x38] sm:$0xff] %v824
          %v834 = vld [vmem:[%s360 + $0xb] sm:$0xff]
          %v835 = vld [vmem:[%s360 + $0x23] sm:$0xff]
          %v836 = vld [vmem:[%s360 + $0x3b] sm:$0xff]
          %v837 = vld [vmem:[%s360 + $0x53] sm:$0xff]
          %s838 = scalar_lea.vmem [#allocation3], 1888
          %839 = vst [vmem:[%s838] sm:$0xff] %v834
          %840 = vst [vmem:[%s838 + $0x8] sm:$0xff] %v835
          %841 = vst [vmem:[%s838 + $0x10] sm:$0xff] %v836
          %842 = vst [vmem:[%s838 + $0x18] sm:$0xff] %v837
          %v843 = vld [vmem:[#allocation2 + $0xc] sm:$0xff]
          %v844 = vld [vmem:[#allocation2 + $0x24] sm:$0xff]
          %v845 = vld [vmem:[#allocation2 + $0x3c] sm:$0xff]
          %v846 = vld [vmem:[#allocation2 + $0x54] sm:$0xff]
          %v847 = vld [vmem:[#allocation2 + $0x6c] sm:$0xff]
          %v848 = vld [vmem:[#allocation2 + $0x84] sm:$0xff]
          %v849 = vld [vmem:[#allocation2 + $0x9c] sm:$0xff]
          %v850 = vld [vmem:[#allocation2 + $0xb4] sm:$0xff]
          %s851 = scalar_lea.vmem [#allocation3], 1920
          %852 = vst [vmem:[%s851] sm:$0xff] %v843
          %853 = vst [vmem:[%s851 + $0x8] sm:$0xff] %v844
          %854 = vst [vmem:[%s851 + $0x10] sm:$0xff] %v845
          %855 = vst [vmem:[%s851 + $0x18] sm:$0xff] %v846
          %856 = vst [vmem:[%s851 + $0x20] sm:$0xff] %v847
          %857 = vst [vmem:[%s851 + $0x28] sm:$0xff] %v848
          %858 = vst [vmem:[%s851 + $0x30] sm:$0xff] %v849
          %859 = vst [vmem:[%s851 + $0x38] sm:$0xff] %v850
          %v860 = vld [vmem:[%s342 + $0xc] sm:$0xff]
          %v861 = vld [vmem:[%s342 + $0x24] sm:$0xff]
          %v862 = vld [vmem:[%s342 + $0x3c] sm:$0xff]
          %v863 = vld [vmem:[%s342 + $0x54] sm:$0xff]
          %v864 = vld [vmem:[%s342 + $0x6c] sm:$0xff]
          %v865 = vld [vmem:[%s342 + $0x84] sm:$0xff]
          %v866 = vld [vmem:[%s342 + $0x9c] sm:$0xff]
          %v867 = vld [vmem:[%s342 + $0xb4] sm:$0xff]
          %s868 = scalar_lea.vmem [#allocation3], 1984
          %869 = vst [vmem:[%s868] sm:$0xff] %v860
          %870 = vst [vmem:[%s868 + $0x8] sm:$0xff] %v861
          %871 = vst [vmem:[%s868 + $0x10] sm:$0xff] %v862
          %872 = vst [vmem:[%s868 + $0x18] sm:$0xff] %v863
          %873 = vst [vmem:[%s868 + $0x20] sm:$0xff] %v864
          %874 = vst [vmem:[%s868 + $0x28] sm:$0xff] %v865
          %875 = vst [vmem:[%s868 + $0x30] sm:$0xff] %v866
          %876 = vst [vmem:[%s868 + $0x38] sm:$0xff] %v867
          %v877 = vld [vmem:[%s360 + $0xc] sm:$0xff]
          %v878 = vld [vmem:[%s360 + $0x24] sm:$0xff]
          %v879 = vld [vmem:[%s360 + $0x3c] sm:$0xff]
          %v880 = vld [vmem:[%s360 + $0x54] sm:$0xff]
          %s881 = scalar_lea.vmem [#allocation3], 2048
          %882 = vst [vmem:[%s881] sm:$0xff] %v877
          %883 = vst [vmem:[%s881 + $0x8] sm:$0xff] %v878
          %884 = vst [vmem:[%s881 + $0x10] sm:$0xff] %v879
          %885 = vst [vmem:[%s881 + $0x18] sm:$0xff] %v880
        $region44: #{tpu_custom_call.1} parent=31 // pred_fallthru
          _
        %s886 = smul.u32 %s28, 8
        %v887 = vld [vmem:[%s250] sm:$0x1]
        %v889 = vlaneseq
        %v890 = vshrl.u32 %v889, 7
        %v891 = vsub.s32 0, %v890
        %v892 = vrot.slane %v887, %v891
        loop: start=0, step=1, limit=13
        $region45: #{tpu_custom_call.1} parent=31 // loop_pre_header
          _
        $region46: #{tpu_custom_call.1} parent=31 // loop_header
          %s895 = sphi 0, %s899
          %p896 = scmp.ge.s32.totalorder %s895, 13
          %v900 = vphi %v892, %v1308
          %v901 = vphi %v892, %v1309
          %v902 = vphi %v892, %v1310
          %v903 = vphi %v892, %v1311
          %v904 = vphi %v892, %v1312
          %v905 = vphi %v892, %v1313
          %v906 = vphi %v892, %v1314
          %v907 = vphi %v892, %v1315
        $region47: #{tpu_custom_call.1} parent=31 // loop_header_branch
          %898 = sbr.rel (%p896) target = $region51
        $region48: #{tpu_custom_call.1} parent=31 // loop_body
          %s908 = smul.u32 %s895, 16
          %s909 = scalar_lea.vmem [#allocation7], %s908
          %v910 = vld [vmem:[%s909] sm:$0xff]
          %v911 = vld [vmem:[%s909 + $0x8] sm:$0x1f]
          %s912 = smul.u32 %s895, 160
          %s913 = scalar_lea.vmem [#allocation3], %s912
          %s914 = smul.u32 %s886, 8
          %s915 = scalar_lea.vmem %s913, %s914 [#allocation3]
          %v916 = vld [vmem:[%s915] sm:$0xff]
          %v917 = vld [vmem:[%s915 + $0x8] sm:$0xff]
          %v918 = vld [vmem:[%s915 + $0x10] sm:$0xff]
          %v919 = vld [vmem:[%s915 + $0x18] sm:$0xff]
          %v920 = vld [vmem:[%s915 + $0x20] sm:$0xff]
          %v921 = vld [vmem:[%s915 + $0x28] sm:$0xff]
          %v922 = vld [vmem:[%s915 + $0x30] sm:$0xff]
          %v923 = vld [vmem:[%s915 + $0x38] sm:$0xff]
          %v924 = vlaneseq
          %v925 = vshrl.u32 %v924, 7
          %v926 = vsub.s32 0, %v925
          %v927 = vrot.slane %v910, %v926
          %v928 = vmul.f32 %v916, %v927
          %v929 = vmul.f32 %v917, %v927
          %v930 = vmul.f32 %v918, %v927
          %v931 = vmul.f32 %v919, %v927
          %v932 = vmul.f32 %v920, %v927
          %v933 = vmul.f32 %v921, %v927
          %v934 = vmul.f32 %v922, %v927
          %v935 = vmul.f32 %v923, %v927
          %v936 = vadd.f32 %v900, %v928
          %v937 = vadd.f32 %v901, %v929
          %v938 = vadd.f32 %v902, %v930
          %v939 = vadd.f32 %v903, %v931
          %v940 = vadd.f32 %v904, %v932
          %v941 = vadd.f32 %v905, %v933
          %v942 = vadd.f32 %v906, %v934
          %v943 = vadd.f32 %v907, %v935
          %s944 = sadd.s32 %s886, 1
          %s945 = smul.u32 %s944, 8
          %s946 = scalar_lea.vmem %s913, %s945 [#allocation3]
          %v947 = vld [vmem:[%s946] sm:$0xff]
          %v948 = vld [vmem:[%s946 + $0x8] sm:$0xff]
          %v949 = vld [vmem:[%s946 + $0x10] sm:$0xff]
          %v950 = vld [vmem:[%s946 + $0x18] sm:$0xff]
          %v951 = vld [vmem:[%s946 + $0x20] sm:$0xff]
          %v952 = vld [vmem:[%s946 + $0x28] sm:$0xff]
          %v953 = vld [vmem:[%s946 + $0x30] sm:$0xff]
          %v954 = vld [vmem:[%s946 + $0x38] sm:$0xff]
          %v955 = vlaneseq
          %v956 = vshrl.u32 %v955, 7
          %v957 = vsub.s32 1, %v956
          %v958 = vrot.slane %v910, %v957
          %v959 = vmul.f32 %v947, %v958
          %v960 = vmul.f32 %v948, %v958
          %v961 = vmul.f32 %v949, %v958
          %v962 = vmul.f32 %v950, %v958
          %v963 = vmul.f32 %v951, %v958
          %v964 = vmul.f32 %v952, %v958
          %v965 = vmul.f32 %v953, %v958
          %v966 = vmul.f32 %v954, %v958
          %v967 = vadd.f32 %v936, %v959
          %v968 = vadd.f32 %v937, %v960
          %v969 = vadd.f32 %v938, %v961
          %v970 = vadd.f32 %v939, %v962
          %v971 = vadd.f32 %v940, %v963
          %v972 = vadd.f32 %v941, %v964
          %v973 = vadd.f32 %v942, %v965
          %v974 = vadd.f32 %v943, %v966
          %s975 = sadd.s32 %s886, 2
          %s976 = smul.u32 %s975, 8
          %s977 = scalar_lea.vmem %s913, %s976 [#allocation3]
          %v978 = vld [vmem:[%s977] sm:$0xff]
          %v979 = vld [vmem:[%s977 + $0x8] sm:$0xff]
          %v980 = vld [vmem:[%s977 + $0x10] sm:$0xff]
          %v981 = vld [vmem:[%s977 + $0x18] sm:$0xff]
          %v982 = vld [vmem:[%s977 + $0x20] sm:$0xff]
          %v983 = vld [vmem:[%s977 + $0x28] sm:$0xff]
          %v984 = vld [vmem:[%s977 + $0x30] sm:$0xff]
          %v985 = vld [vmem:[%s977 + $0x38] sm:$0xff]
          %v986 = vlaneseq
          %v987 = vshrl.u32 %v986, 7
          %v988 = vsub.s32 2, %v987
          %v989 = vrot.slane %v910, %v988
          %v990 = vmul.f32 %v978, %v989
          %v991 = vmul.f32 %v979, %v989
          %v992 = vmul.f32 %v980, %v989
          %v993 = vmul.f32 %v981, %v989
          %v994 = vmul.f32 %v982, %v989
          %v995 = vmul.f32 %v983, %v989
          %v996 = vmul.f32 %v984, %v989
          %v997 = vmul.f32 %v985, %v989
          %v998 = vadd.f32 %v967, %v990
          %v999 = vadd.f32 %v968, %v991
          %v1000 = vadd.f32 %v969, %v992
          %v1001 = vadd.f32 %v970, %v993
          %v1002 = vadd.f32 %v971, %v994
          %v1003 = vadd.f32 %v972, %v995
          %v1004 = vadd.f32 %v973, %v996
          %v1005 = vadd.f32 %v974, %v997
          %s1006 = sadd.s32 %s886, 3
          %s1007 = smul.u32 %s1006, 8
          %s1008 = scalar_lea.vmem %s913, %s1007 [#allocation3]
          %v1009 = vld [vmem:[%s1008] sm:$0xff]
          %v1010 = vld [vmem:[%s1008 + $0x8] sm:$0xff]
          %v1011 = vld [vmem:[%s1008 + $0x10] sm:$0xff]
          %v1012 = vld [vmem:[%s1008 + $0x18] sm:$0xff]
          %v1013 = vld [vmem:[%s1008 + $0x20] sm:$0xff]
          %v1014 = vld [vmem:[%s1008 + $0x28] sm:$0xff]
          %v1015 = vld [vmem:[%s1008 + $0x30] sm:$0xff]
          %v1016 = vld [vmem:[%s1008 + $0x38] sm:$0xff]
          %v1017 = vlaneseq
          %v1018 = vshrl.u32 %v1017, 7
          %v1019 = vsub.s32 3, %v1018
          %v1020 = vrot.slane %v910, %v1019
          %v1021 = vmul.f32 %v1009, %v1020
          %v1022 = vmul.f32 %v1010, %v1020
          %v1023 = vmul.f32 %v1011, %v1020
          %v1024 = vmul.f32 %v1012, %v1020
          %v1025 = vmul.f32 %v1013, %v1020
          %v1026 = vmul.f32 %v1014, %v1020
          %v1027 = vmul.f32 %v1015, %v1020
          %v1028 = vmul.f32 %v1016, %v1020
          %v1029 = vadd.f32 %v998, %v1021
          %v1030 = vadd.f32 %v999, %v1022
          %v1031 = vadd.f32 %v1000, %v1023
          %v1032 = vadd.f32 %v1001, %v1024
          %v1033 = vadd.f32 %v1002, %v1025
          %v1034 = vadd.f32 %v1003, %v1026
          %v1035 = vadd.f32 %v1004, %v1027
          %v1036 = vadd.f32 %v1005, %v1028
          %s1037 = sadd.s32 %s886, 4
          %s1038 = smul.u32 %s1037, 8
          %s1039 = scalar_lea.vmem %s913, %s1038 [#allocation3]
          %v1040 = vld [vmem:[%s1039] sm:$0xff]
          %v1041 = vld [vmem:[%s1039 + $0x8] sm:$0xff]
          %v1042 = vld [vmem:[%s1039 + $0x10] sm:$0xff]
          %v1043 = vld [vmem:[%s1039 + $0x18] sm:$0xff]
          %v1044 = vld [vmem:[%s1039 + $0x20] sm:$0xff]
          %v1045 = vld [vmem:[%s1039 + $0x28] sm:$0xff]
          %v1046 = vld [vmem:[%s1039 + $0x30] sm:$0xff]
          %v1047 = vld [vmem:[%s1039 + $0x38] sm:$0xff]
          %v1048 = vlaneseq
          %v1049 = vshrl.u32 %v1048, 7
          %v1050 = vsub.s32 4, %v1049
          %v1051 = vrot.slane %v910, %v1050
          %v1052 = vmul.f32 %v1040, %v1051
          %v1053 = vmul.f32 %v1041, %v1051
          %v1054 = vmul.f32 %v1042, %v1051
          %v1055 = vmul.f32 %v1043, %v1051
          %v1056 = vmul.f32 %v1044, %v1051
          %v1057 = vmul.f32 %v1045, %v1051
          %v1058 = vmul.f32 %v1046, %v1051
          %v1059 = vmul.f32 %v1047, %v1051
          %v1060 = vadd.f32 %v1029, %v1052
          %v1061 = vadd.f32 %v1030, %v1053
          %v1062 = vadd.f32 %v1031, %v1054
          %v1063 = vadd.f32 %v1032, %v1055
          %v1064 = vadd.f32 %v1033, %v1056
          %v1065 = vadd.f32 %v1034, %v1057
          %v1066 = vadd.f32 %v1035, %v1058
          %v1067 = vadd.f32 %v1036, %v1059
          %s1068 = sadd.s32 %s886, 5
          %s1069 = smul.u32 %s1068, 8
          %s1070 = scalar_lea.vmem %s913, %s1069 [#allocation3]
          %v1071 = vld [vmem:[%s1070] sm:$0xff]
          %v1072 = vld [vmem:[%s1070 + $0x8] sm:$0xff]
          %v1073 = vld [vmem:[%s1070 + $0x10] sm:$0xff]
          %v1074 = vld [vmem:[%s1070 + $0x18] sm:$0xff]
          %v1075 = vld [vmem:[%s1070 + $0x20] sm:$0xff]
          %v1076 = vld [vmem:[%s1070 + $0x28] sm:$0xff]
          %v1077 = vld [vmem:[%s1070 + $0x30] sm:$0xff]
          %v1078 = vld [vmem:[%s1070 + $0x38] sm:$0xff]
          %v1079 = vlaneseq
          %v1080 = vshrl.u32 %v1079, 7
          %v1081 = vsub.s32 5, %v1080
          %v1082 = vrot.slane %v910, %v1081
          %v1083 = vmul.f32 %v1071, %v1082
          %v1084 = vmul.f32 %v1072, %v1082
          %v1085 = vmul.f32 %v1073, %v1082
          %v1086 = vmul.f32 %v1074, %v1082
          %v1087 = vmul.f32 %v1075, %v1082
          %v1088 = vmul.f32 %v1076, %v1082
          %v1089 = vmul.f32 %v1077, %v1082
          %v1090 = vmul.f32 %v1078, %v1082
          %v1091 = vadd.f32 %v1060, %v1083
          %v1092 = vadd.f32 %v1061, %v1084
          %v1093 = vadd.f32 %v1062, %v1085
          %v1094 = vadd.f32 %v1063, %v1086
          %v1095 = vadd.f32 %v1064, %v1087
          %v1096 = vadd.f32 %v1065, %v1088
          %v1097 = vadd.f32 %v1066, %v1089
          %v1098 = vadd.f32 %v1067, %v1090
          %s1099 = sadd.s32 %s886, 6
          %s1100 = smul.u32 %s1099, 8
          %s1101 = scalar_lea.vmem %s913, %s1100 [#allocation3]
          %v1102 = vld [vmem:[%s1101] sm:$0xff]
          %v1103 = vld [vmem:[%s1101 + $0x8] sm:$0xff]
          %v1104 = vld [vmem:[%s1101 + $0x10] sm:$0xff]
          %v1105 = vld [vmem:[%s1101 + $0x18] sm:$0xff]
          %v1106 = vld [vmem:[%s1101 + $0x20] sm:$0xff]
          %v1107 = vld [vmem:[%s1101 + $0x28] sm:$0xff]
          %v1108 = vld [vmem:[%s1101 + $0x30] sm:$0xff]
          %v1109 = vld [vmem:[%s1101 + $0x38] sm:$0xff]
          %v1110 = vlaneseq
          %v1111 = vshrl.u32 %v1110, 7
          %v1112 = vsub.s32 6, %v1111
          %v1113 = vrot.slane %v910, %v1112
          %v1114 = vmul.f32 %v1102, %v1113
          %v1115 = vmul.f32 %v1103, %v1113
          %v1116 = vmul.f32 %v1104, %v1113
          %v1117 = vmul.f32 %v1105, %v1113
          %v1118 = vmul.f32 %v1106, %v1113
          %v1119 = vmul.f32 %v1107, %v1113
          %v1120 = vmul.f32 %v1108, %v1113
          %v1121 = vmul.f32 %v1109, %v1113
          %v1122 = vadd.f32 %v1091, %v1114
          %v1123 = vadd.f32 %v1092, %v1115
          %v1124 = vadd.f32 %v1093, %v1116
          %v1125 = vadd.f32 %v1094, %v1117
          %v1126 = vadd.f32 %v1095, %v1118
          %v1127 = vadd.f32 %v1096, %v1119
          %v1128 = vadd.f32 %v1097, %v1120
          %v1129 = vadd.f32 %v1098, %v1121
          %s1130 = sadd.s32 %s886, 7
          %s1131 = smul.u32 %s1130, 8
          %s1132 = scalar_lea.vmem %s913, %s1131 [#allocation3]
          %v1133 = vld [vmem:[%s1132] sm:$0xff]
          %v1134 = vld [vmem:[%s1132 + $0x8] sm:$0xff]
          %v1135 = vld [vmem:[%s1132 + $0x10] sm:$0xff]
          %v1136 = vld [vmem:[%s1132 + $0x18] sm:$0xff]
          %v1137 = vld [vmem:[%s1132 + $0x20] sm:$0xff]
          %v1138 = vld [vmem:[%s1132 + $0x28] sm:$0xff]
          %v1139 = vld [vmem:[%s1132 + $0x30] sm:$0xff]
          %v1140 = vld [vmem:[%s1132 + $0x38] sm:$0xff]
          %v1141 = vlaneseq
          %v1142 = vshrl.u32 %v1141, 7
          %v1143 = vsub.s32 7, %v1142
          %v1144 = vrot.slane %v910, %v1143
          %v1145 = vmul.f32 %v1133, %v1144
          %v1146 = vmul.f32 %v1134, %v1144
          %v1147 = vmul.f32 %v1135, %v1144
          %v1148 = vmul.f32 %v1136, %v1144
          %v1149 = vmul.f32 %v1137, %v1144
          %v1150 = vmul.f32 %v1138, %v1144
          %v1151 = vmul.f32 %v1139, %v1144
          %v1152 = vmul.f32 %v1140, %v1144
          %v1153 = vadd.f32 %v1122, %v1145
          %v1154 = vadd.f32 %v1123, %v1146
          %v1155 = vadd.f32 %v1124, %v1147
          %v1156 = vadd.f32 %v1125, %v1148
          %v1157 = vadd.f32 %v1126, %v1149
          %v1158 = vadd.f32 %v1127, %v1150
          %v1159 = vadd.f32 %v1128, %v1151
          %v1160 = vadd.f32 %v1129, %v1152
          %s1161 = sadd.s32 %s886, 8
          %s1162 = smul.u32 %s1161, 8
          %s1163 = scalar_lea.vmem %s913, %s1162 [#allocation3]
          %v1164 = vld [vmem:[%s1163] sm:$0xff]
          %v1165 = vld [vmem:[%s1163 + $0x8] sm:$0xff]
          %v1166 = vld [vmem:[%s1163 + $0x10] sm:$0xff]
          %v1167 = vld [vmem:[%s1163 + $0x18] sm:$0xff]
          %v1168 = vld [vmem:[%s1163 + $0x20] sm:$0xff]
          %v1169 = vld [vmem:[%s1163 + $0x28] sm:$0xff]
          %v1170 = vld [vmem:[%s1163 + $0x30] sm:$0xff]
          %v1171 = vld [vmem:[%s1163 + $0x38] sm:$0xff]
          %v1172 = vlaneseq
          %v1173 = vshrl.u32 %v1172, 7
          %v1174 = vsub.s32 0, %v1173
          %v1175 = vrot.slane %v911, %v1174
          %v1176 = vmul.f32 %v1164, %v1175
          %v1177 = vmul.f32 %v1165, %v1175
          %v1178 = vmul.f32 %v1166, %v1175
          %v1179 = vmul.f32 %v1167, %v1175
          %v1180 = vmul.f32 %v1168, %v1175
          %v1181 = vmul.f32 %v1169, %v1175
          %v1182 = vmul.f32 %v1170, %v1175
          %v1183 = vmul.f32 %v1171, %v1175
          %v1184 = vadd.f32 %v1153, %v1176
          %v1185 = vadd.f32 %v1154, %v1177
          %v1186 = vadd.f32 %v1155, %v1178
          %v1187 = vadd.f32 %v1156, %v1179
          %v1188 = vadd.f32 %v1157, %v1180
          %v1189 = vadd.f32 %v1158, %v1181
          %v1190 = vadd.f32 %v1159, %v1182
          %v1191 = vadd.f32 %v1160, %v1183
          %s1192 = sadd.s32 %s886, 9
          %s1193 = smul.u32 %s1192, 8
          %s1194 = scalar_lea.vmem %s913, %s1193 [#allocation3]
          %v1195 = vld [vmem:[%s1194] sm:$0xff]
          %v1196 = vld [vmem:[%s1194 + $0x8] sm:$0xff]
          %v1197 = vld [vmem:[%s1194 + $0x10] sm:$0xff]
          %v1198 = vld [vmem:[%s1194 + $0x18] sm:$0xff]
          %v1199 = vld [vmem:[%s1194 + $0x20] sm:$0xff]
          %v1200 = vld [vmem:[%s1194 + $0x28] sm:$0xff]
          %v1201 = vld [vmem:[%s1194 + $0x30] sm:$0xff]
          %v1202 = vld [vmem:[%s1194 + $0x38] sm:$0xff]
          %v1203 = vlaneseq
          %v1204 = vshrl.u32 %v1203, 7
          %v1205 = vsub.s32 1, %v1204
          %v1206 = vrot.slane %v911, %v1205
          %v1207 = vmul.f32 %v1195, %v1206
          %v1208 = vmul.f32 %v1196, %v1206
          %v1209 = vmul.f32 %v1197, %v1206
          %v1210 = vmul.f32 %v1198, %v1206
          %v1211 = vmul.f32 %v1199, %v1206
          %v1212 = vmul.f32 %v1200, %v1206
          %v1213 = vmul.f32 %v1201, %v1206
          %v1214 = vmul.f32 %v1202, %v1206
          %v1215 = vadd.f32 %v1184, %v1207
          %v1216 = vadd.f32 %v1185, %v1208
          %v1217 = vadd.f32 %v1186, %v1209
          %v1218 = vadd.f32 %v1187, %v1210
          %v1219 = vadd.f32 %v1188, %v1211
          %v1220 = vadd.f32 %v1189, %v1212
          %v1221 = vadd.f32 %v1190, %v1213
          %v1222 = vadd.f32 %v1191, %v1214
          %s1223 = sadd.s32 %s886, 10
          %s1224 = smul.u32 %s1223, 8
          %s1225 = scalar_lea.vmem %s913, %s1224 [#allocation3]
          %v1226 = vld [vmem:[%s1225] sm:$0xff]
          %v1227 = vld [vmem:[%s1225 + $0x8] sm:$0xff]
          %v1228 = vld [vmem:[%s1225 + $0x10] sm:$0xff]
          %v1229 = vld [vmem:[%s1225 + $0x18] sm:$0xff]
          %v1230 = vld [vmem:[%s1225 + $0x20] sm:$0xff]
          %v1231 = vld [vmem:[%s1225 + $0x28] sm:$0xff]
          %v1232 = vld [vmem:[%s1225 + $0x30] sm:$0xff]
          %v1233 = vld [vmem:[%s1225 + $0x38] sm:$0xff]
          %v1234 = vlaneseq
          %v1235 = vshrl.u32 %v1234, 7
          %v1236 = vsub.s32 2, %v1235
          %v1237 = vrot.slane %v911, %v1236
          %v1238 = vmul.f32 %v1226, %v1237
          %v1239 = vmul.f32 %v1227, %v1237
          %v1240 = vmul.f32 %v1228, %v1237
          %v1241 = vmul.f32 %v1229, %v1237
          %v1242 = vmul.f32 %v1230, %v1237
          %v1243 = vmul.f32 %v1231, %v1237
          %v1244 = vmul.f32 %v1232, %v1237
          %v1245 = vmul.f32 %v1233, %v1237
          %v1246 = vadd.f32 %v1215, %v1238
          %v1247 = vadd.f32 %v1216, %v1239
          %v1248 = vadd.f32 %v1217, %v1240
          %v1249 = vadd.f32 %v1218, %v1241
          %v1250 = vadd.f32 %v1219, %v1242
          %v1251 = vadd.f32 %v1220, %v1243
          %v1252 = vadd.f32 %v1221, %v1244
          %v1253 = vadd.f32 %v1222, %v1245
          %s1254 = sadd.s32 %s886, 11
          %s1255 = smul.u32 %s1254, 8
          %s1256 = scalar_lea.vmem %s913, %s1255 [#allocation3]
          %v1257 = vld [vmem:[%s1256] sm:$0xff]
          %v1258 = vld [vmem:[%s1256 + $0x8] sm:$0xff]
          %v1259 = vld [vmem:[%s1256 + $0x10] sm:$0xff]
          %v1260 = vld [vmem:[%s1256 + $0x18] sm:$0xff]
          %v1261 = vld [vmem:[%s1256 + $0x20] sm:$0xff]
          %v1262 = vld [vmem:[%s1256 + $0x28] sm:$0xff]
          %v1263 = vld [vmem:[%s1256 + $0x30] sm:$0xff]
          %v1264 = vld [vmem:[%s1256 + $0x38] sm:$0xff]
          %v1265 = vlaneseq
          %v1266 = vshrl.u32 %v1265, 7
          %v1267 = vsub.s32 3, %v1266
          %v1268 = vrot.slane %v911, %v1267
          %v1269 = vmul.f32 %v1257, %v1268
          %v1270 = vmul.f32 %v1258, %v1268
          %v1271 = vmul.f32 %v1259, %v1268
          %v1272 = vmul.f32 %v1260, %v1268
          %v1273 = vmul.f32 %v1261, %v1268
          %v1274 = vmul.f32 %v1262, %v1268
          %v1275 = vmul.f32 %v1263, %v1268
          %v1276 = vmul.f32 %v1264, %v1268
          %v1277 = vadd.f32 %v1246, %v1269
          %v1278 = vadd.f32 %v1247, %v1270
          %v1279 = vadd.f32 %v1248, %v1271
          %v1280 = vadd.f32 %v1249, %v1272
          %v1281 = vadd.f32 %v1250, %v1273
          %v1282 = vadd.f32 %v1251, %v1274
          %v1283 = vadd.f32 %v1252, %v1275
          %v1284 = vadd.f32 %v1253, %v1276
          %s1285 = sadd.s32 %s886, 12
          %s1286 = smul.u32 %s1285, 8
          %s1287 = scalar_lea.vmem %s913, %s1286 [#allocation3]
          %v1288 = vld [vmem:[%s1287] sm:$0xff]
          %v1289 = vld [vmem:[%s1287 + $0x8] sm:$0xff]
          %v1290 = vld [vmem:[%s1287 + $0x10] sm:$0xff]
          %v1291 = vld [vmem:[%s1287 + $0x18] sm:$0xff]
          %v1292 = vld [vmem:[%s1287 + $0x20] sm:$0xff]
          %v1293 = vld [vmem:[%s1287 + $0x28] sm:$0xff]
          %v1294 = vld [vmem:[%s1287 + $0x30] sm:$0xff]
          %v1295 = vld [vmem:[%s1287 + $0x38] sm:$0xff]
          %v1296 = vlaneseq
          %v1297 = vshrl.u32 %v1296, 7
          %v1298 = vsub.s32 4, %v1297
          %v1299 = vrot.slane %v911, %v1298
          %v1300 = vmul.f32 %v1288, %v1299
          %v1301 = vmul.f32 %v1289, %v1299
          %v1302 = vmul.f32 %v1290, %v1299
          %v1303 = vmul.f32 %v1291, %v1299
          %v1304 = vmul.f32 %v1292, %v1299
          %v1305 = vmul.f32 %v1293, %v1299
          %v1306 = vmul.f32 %v1294, %v1299
          %v1307 = vmul.f32 %v1295, %v1299
          %v1308 = vadd.f32 %v1277, %v1300
          %v1309 = vadd.f32 %v1278, %v1301
          %v1310 = vadd.f32 %v1279, %v1302
          %v1311 = vadd.f32 %v1280, %v1303
          %v1312 = vadd.f32 %v1281, %v1304
          %v1313 = vadd.f32 %v1282, %v1305
          %v1314 = vadd.f32 %v1283, %v1306
          %v1315 = vadd.f32 %v1284, %v1307
        $region49: #{tpu_custom_call.1} parent=31 // loop_footer
          %s899 = sadd.s32 1, %s895
        $region50: #{tpu_custom_call.1} parent=31 // loop_footer_branch
          %894 = sbr.rel target = $region46
        $region51: #{tpu_custom_call.1} parent=31 // loop_exit
          _
        %1316 = vst [vmem:[%s247] sm:$0xff] %v900
        %1317 = vst [vmem:[%s247 + $0x8] sm:$0xff] %v901
        %1318 = vst [vmem:[%s247 + $0x10] sm:$0xff] %v902
        %1319 = vst [vmem:[%s247 + $0x18] sm:$0xff] %v903
        %1320 = vst [vmem:[%s247 + $0x20] sm:$0xff] %v904
        %1321 = vst [vmem:[%s247 + $0x28] sm:$0xff] %v905
        %1322 = vst [vmem:[%s247 + $0x30] sm:$0xff] %v906
        %1323 = vst [vmem:[%s247 + $0x38] sm:$0xff] %v907
        %s1324 = sand.u32 %s132, 1
        %s1325 = scalar_lea.sflag [#allocation6], %s1324
        %s1326 = sand.u32 %s132, 1
        %s1327 = smul.addr %s1326, 64
        %s1328 = scalar_lea.vmem [#allocation9], %s1327
        // Predicated region
        $region52: #{tpu_custom_call.1} parent=31 // pred_check
          %p1329 = pneg %p142
        $region53: #{tpu_custom_call.1} parent=31 // pred_check_branch
          %1331 = sbr.rel (%p1329) target = $region55
        $region54: #{tpu_custom_call.1} parent=31 // pred_region
          %s1332 = smul.u32 8, %s28
          %s1334 = ssub.s32 1024, 1024
          %1335 = vsyncadd %s1325, %s1334
          %s1336 = sadd.s32 %s27, %s1332
          %s1337 = smul.addr %s26, 8
          %s1338 = sadd.s32 %s1336, %s1337
          %s1339 = smul.addr %s1338, 128
          %s1340 = scalar_lea.hbm %s3, %s1339
          %s1341 = sshll.u32 %s1328, 4
          %s1342 = int_to_ptr.vmem [resolvable:$true] %s1341
          %1347 = dma.vmem_to_hbm [thread:$0]  %s1342, 1024, %s1340, %s1325, 128, 128, 8
        $region55: #{tpu_custom_call.1} parent=31 // pred_fallthru
          _
      $region32: #{tpu_custom_call.1} parent=5 // pred_fallthru
        _
      %p1348 = scmp.le.s32.totalorder 2, %s16
      // Predicated region
      $region56: #{tpu_custom_call.1} parent=5 // pred_check
        %p1349 = pneg %p1348
      $region57: #{tpu_custom_call.1} parent=5 // pred_check_branch
        %1351 = sbr.rel (%p1349) target = $region59
      $region58: #{tpu_custom_call.1} parent=5 // pred_region
        %s1352 = ssub.s32 %s16, 2
        // Predicated region
        $region60: #{tpu_custom_call.1} parent=58 // pred_check
          %p1353 = pneg %p148
        $region61: #{tpu_custom_call.1} parent=58 // pred_check_branch
          %1355 = sbr.rel (%p1353) target = $region63
        $region62: #{tpu_custom_call.1} parent=58 // pred_region
          %s1356 = sand.u32 %s133, 1
          %s1357 = scalar_lea.sflag [#allocation6], %s1356
          %s1358 = sand.u32 %s133, 1
          %s1359 = smul.addr %s1358, 64
          %s1360 = scalar_lea.vmem [#allocation9], %s1359
          %1361 = dma.done %s1357, 1024
        $region63: #{tpu_custom_call.1} parent=58 // pred_fallthru
          _
      $region59: #{tpu_custom_call.1} parent=5 // pred_fallthru
        _
    $region6: #{tpu_custom_call.1} parent=1 // loop_footer
      %s20 = sadd.s32 1, %s16
    $region7: #{tpu_custom_call.1} parent=1 // loop_footer_branch
      %15 = sbr.rel target = $region3
    $region8: #{tpu_custom_call.1} parent=1 // loop_exit
      _
    %1362 = vsyncpa [#allocation5], 1
    %s1363 = scalar_lea.sflag [#allocation5], 1
    %1364 = vsyncpa %s1363, 1
    %1365 = vsyncpa [#allocation8], 1
    %1366 = vsyncpa [#allocation6], 1
    %s1367 = scalar_lea.sflag [#allocation6], 1
    %1368 = vsyncpa %s1367, 1

</llo_original>
